<compile_context>
chip_gen: v7x
topology: tpu7x:2x2x1
jax: 0.10.0
libtpu: 0.0.40
codegen_flags: <defaults>
</compile_context>

<pallas_src>
import numpy as np
import jax
import jax.numpy as jnp
from jax import lax
from jax.experimental import pallas as pl
from jax.experimental.pallas import tpu as pltpu


# ------------------------------------------------------------------ per-layer
def _conv_relu_pool_layer(x2d, w_ref, b_ref, idx_ref, L_seg, batch):
    """One Conv1d(k=3, pad=1) + ReLU + MaxPool1d(2, return_indices) stage.

    x2d:     (C_in, batch*L_seg) f32 value — channels on sublanes, batch*length on lanes.
    w_ref:   (3, C_out, C_in) VMEM ref     — conv taps, tap-major.
    b_ref:   (C_out, 1) VMEM ref.
    idx_ref: (batch, C_out, L_seg // 2) int32 output ref (pool argmax indices).
    Returns pooled activations as a (C_out, batch*L_seg//2) f32 value.
    """
    c_in, n = x2d.shape
    assert n == batch * L_seg and L_seg % 2 == 0
    c_out = w_ref.shape[1]
    nh = n // 2
    lh = L_seg // 2
    f32 = jnp.float32

    # ---- constant +/-1 shift matrices along the fused batch*length axis.
    # Zeroed columns at batch-segment boundaries implement the 'same' padding.
    r = lax.broadcasted_iota(jnp.int32, (n, n), 0)
    c = lax.broadcasted_iota(jnp.int32, (n, n), 1)
    prev_ok = (r + 1) == c                    # x @ shr -> x shifted right by 1
    next_ok = r == (c + 1)                    # x @ shl -> x shifted left  by 1
    for b in range(1, batch):                 # mask across batch boundaries
        prev_ok = jnp.logical_and(prev_ok, c != b * L_seg)
        next_ok = jnp.logical_and(next_ok, c != b * L_seg - 1)
    shr = jnp.where(prev_ok, 1.0, 0.0)
    shl = jnp.where(next_ok, 1.0, 0.0)
    x_prev = jnp.dot(x2d, shr, preferred_element_type=f32)   # x[:, j-1] (zero pad)
    x_next = jnp.dot(x2d, shl, preferred_element_type=f32)   # x[:, j+1] (zero pad)

    # ---- Conv1d (3 taps over the whole batch at once) + bias + ReLU.
    y = (jnp.dot(w_ref[0], x_prev, preferred_element_type=f32)
         + jnp.dot(w_ref[1], x2d, preferred_element_type=f32)
         + jnp.dot(w_ref[2], x_next, preferred_element_type=f32)
         + b_ref[...])                                        # (C_out,1) broadcast
    y = jnp.maximum(y, 0.0)                                   # (C_out, n)

    # ---- MaxPool1d(kernel=2, stride=2): even/odd de-interleave with 0/1
    # selection matmuls (exact copies), then compare/select on the VPU.
    rs = lax.broadcasted_iota(jnp.int32, (n, nh), 0)
    cs = lax.broadcasted_iota(jnp.int32, (n, nh), 1)
    sel_even = jnp.where(rs == 2 * cs, 1.0, 0.0)
    sel_odd = jnp.where(rs == 2 * cs + 1, 1.0, 0.0)
    y_even = jnp.dot(y, sel_even, preferred_element_type=f32)  # (C_out, nh)
    y_odd = jnp.dot(y, sel_odd, preferred_element_type=f32)
    take_even = y_even >= y_odd             # ties -> even (first) index
    pooled = jnp.where(take_even, y_even, y_odd)

    # ---- PyTorch-style indices into the per-batch (pre-pool) length axis.
    pcol = lax.broadcasted_iota(jnp.int32, (c_out, nh), 1)
    base = 2 * pcol
    for b in range(1, batch):               # remove each batch-segment offset
        base = base - jnp.where(pcol >= b * lh, L_seg, 0)
    idx = jnp.where(take_even, base, base + 1)                # int32

    # ---- write indices back in PyTorch NCL layout (batch, C_out, L_seg//2).
    for b in range(batch):
        idx_ref[b, :, :] = idx[:, b * lh:(b + 1) * lh]

    return pooled


# ------------------------------------------------------------------ the kernel
def _make_x_enc_kernel(seg_lens, batch):
    n_layers = len(seg_lens)

    def kernel(*refs):
        x_ref = refs[0]
        w_refs = refs[1:1 + 2 * n_layers:2]
        b_refs = refs[2:2 + 2 * n_layers:2]
        out_ref = refs[1 + 2 * n_layers]
        idx_refs = refs[2 + 2 * n_layers:]

        x2d = x_ref[...]                     # (C_in, B*L) slab, VMEM-resident
        for li in range(n_layers):
            x2d = _conv_relu_pool_layer(x2d, w_refs[li], b_refs[li],
                                        idx_refs[li], seg_lens[li], batch)

        # final activations back to PyTorch NCL layout (B, C_out, L_out)
        lf = seg_lens[-1] // 2
        for b in range(batch):
            out_ref[b, :, :] = x2d[:, b * lf:(b + 1) * lf]

    return kernel


# ------------------------------------------------------------------ wrapper
def x_enc_forward(x, params):
    """Fused Conv-ReLU-Pool encoder forward. Returns (x, [pool_indices, ...])."""
    B, c_in, L = x.shape
    n_layers = len(params)

    seg_lens, idx_shapes, w_taps, biases = [], [], [], []
    cur_c, cur_l = c_in, L
    for (w, b) in params:
        c_out, c_in_w, k = w.shape
        assert c_in_w == cur_c, "channel mismatch in params"
        assert k == 3, "this kernel instantiates Conv1d(kernel_size=3, padding=1)"
        assert cur_l % 2 == 0, "MaxPool1d(2) needs an even input length"
        w_taps.append(jnp.transpose(w, (2, 0, 1)))        # (K, C_out, C_in)
        biases.append(b.reshape(c_out, 1))
        seg_lens.append(cur_l)
        idx_shapes.append((B, c_out, cur_l // 2))
        cur_c, cur_l = c_out, cur_l // 2

    # fold batch into the matmul N (lane) dimension: (B, C, L) -> (C, B*L)
    x_slab = jnp.transpose(x, (1, 0, 2)).reshape(c_in, B * L)

    vmem = pl.BlockSpec(memory_space=pltpu.MemorySpace.VMEM)
    kernel = _make_x_enc_kernel(tuple(seg_lens), B)

    inputs = [x_slab]
    for wt, bb in zip(w_taps, biases):
        inputs += [wt, bb]

    out_shapes = tuple(
        [jax.ShapeDtypeStruct((B, cur_c, cur_l), jnp.float32)]
        + [jax.ShapeDtypeStruct(s, jnp.int32) for s in idx_shapes])

    res = pl.pallas_call(
        kernel,
        out_shape=out_shapes,
        in_specs=[vmem] * len(inputs),
        out_specs=tuple([vmem] * len(out_shapes)),
    )(*inputs)

    return res[0], list(res[1:])


# ------------------------------------------------------------------ init
def init_params(key, cfg):
    """Kaiming-normal(fan_out, relu) conv weights, zero bias — matches
    X_Enc._initialize_weights for nn.Conv1d."""
    params = []
    for (c_in, c_out, k) in cfg:
        key, kw = jax.random.split(key)
        fan_out = c_out * k
        std = float(np.sqrt(2.0 / fan_out))
        w = std * jax.random.normal(kw, (c_out, c_in, k), dtype=jnp.float32)
        b = jnp.zeros((c_out,), dtype=jnp.float32)
        params.append((w, b))
    return params


# ------------------------------------------------------------------ reference
def _ref_forward(x, params):
    all_idx = []
    for (w, b) in params:
        xp = jnp.pad(x, ((0, 0), (0, 0), (1, 1)))
        y = jnp.einsum("oik,bil->bokl", w, xp)  # (B, C_out, K, L+2)
        L = x.shape[2]
        y = sum(y[:, :, k, k:k + L] for k in range(w.shape[2]))
        y = jnp.maximum(y + b[None, :, None], 0.0)
        a, bb = y[:, :, 0::2], y[:, :, 1::2]
        pos = jnp.arange(y.shape[2] // 2, dtype=jnp.int32)
        take_a = a >= bb
        x = jnp.where(take_a, a, bb)
        all_idx.append(jnp.where(take_a, 2 * pos, 2 * pos + 1))
    return x, all_idx


if __name__ == "__main__":
    key = jax.random.PRNGKey(0)
    k_x, k_p = jax.random.split(key)

    B, C_in, L = 2, 4, 16
    cfg = [(C_in, 8, 3), (8, 16, 3)]          # (c_in, c_out, kernel_size)
    params = init_params(k_p, cfg)
    x = jax.random.normal(k_x, (B, C_in, L), dtype=jnp.float32)

    fwd = jax.jit(x_enc_forward)
    out, pools = fwd(x, params)
    out = jax.block_until_ready(out)
    pools = [jax.block_until_ready(p) for p in pools]

    # correctness check vs. pure-JAX reference
    ref_out, ref_pools = _ref_forward(x, params)
    np.testing.assert_allclose(np.asarray(out), np.asarray(ref_out),
                               rtol=1e-5, atol=1e-5)
    for p, rp in zip(pools, ref_pools):
        np.testing.assert_array_equal(np.asarray(p), np.asarray(rp))

    print("KERNEL_OK")
</pallas_src>

<mosaic_0001>
module attributes {stable_mosaic.version = 11 : i64} {
  func.func @kernel(%arg0: memref<4x32xf32, #tpu.memory_space<vmem>>, %arg1: memref<3x8x4xf32, #tpu.memory_space<vmem>>, %arg2: memref<8x1xf32, #tpu.memory_space<vmem>>, %arg3: memref<3x16x8xf32, #tpu.memory_space<vmem>>, %arg4: memref<16x1xf32, #tpu.memory_space<vmem>>, %arg5: memref<2x16x4xf32, #tpu.memory_space<vmem>>, %arg6: memref<2x8x8xi32, #tpu.memory_space<vmem>>, %arg7: memref<2x16x4xi32, #tpu.memory_space<vmem>>) attributes {dimension_semantics = [], scalar_prefetch = 0 : i64, scratch_operands = 0 : i64, tpu.core_type = #tpu.core_type<tc>} {
    %c0 = arith.constant 0 : index
    %c0_0 = arith.constant 0 : index
    %0 = vector.load %arg0[%c0, %c0_0] : memref<4x32xf32, #tpu.memory_space<vmem>>, vector<4x32xf32>
    %1 = tpu.iota {dimensions = array<i32: 0>} : vector<32x32xi32>
    %2 = tpu.iota {dimensions = array<i32: 1>} : vector<32x32xi32>
    %c1_i32 = arith.constant 1 : i32
    %3 = vector.broadcast %c1_i32 : i32 to vector<32x32xi32>
    %4 = arith.addi %1, %3 : vector<32x32xi32>
    %5 = arith.cmpi eq, %4, %2 : vector<32x32xi32>
    %c1_i32_1 = arith.constant 1 : i32
    %6 = vector.broadcast %c1_i32_1 : i32 to vector<32x32xi32>
    %7 = arith.addi %2, %6 : vector<32x32xi32>
    %8 = arith.cmpi eq, %1, %7 : vector<32x32xi32>
    %c16_i32 = arith.constant 16 : i32
    %9 = vector.broadcast %c16_i32 : i32 to vector<32x32xi32>
    %10 = arith.cmpi ne, %2, %9 : vector<32x32xi32>
    %11 = arith.andi %5, %10 : vector<32x32xi1>
    %c15_i32 = arith.constant 15 : i32
    %12 = vector.broadcast %c15_i32 : i32 to vector<32x32xi32>
    %13 = arith.cmpi ne, %2, %12 : vector<32x32xi32>
    %14 = arith.andi %8, %13 : vector<32x32xi1>
    %cst = arith.constant 1.000000e+00 : f32
    %cst_2 = arith.constant 0.000000e+00 : f32
    %15 = vector.broadcast %cst : f32 to vector<32x32xf32>
    %16 = vector.broadcast %cst_2 : f32 to vector<32x32xf32>
    %17 = arith.select %11, %15, %16 : vector<32x32xi1>, vector<32x32xf32>
    %cst_3 = arith.constant 1.000000e+00 : f32
    %cst_4 = arith.constant 0.000000e+00 : f32
    %18 = vector.broadcast %cst_3 : f32 to vector<32x32xf32>
    %19 = vector.broadcast %cst_4 : f32 to vector<32x32xf32>
    %20 = arith.select %14, %18, %19 : vector<32x32xi1>, vector<32x32xf32>
    %cst_5 = arith.constant dense<0.000000e+00> : vector<4x32xf32>
    %21 = tpu.matmul %0, %17, %cst_5 {dimension_numbers = #tpu.dot_dimension_numbers<[1], [0], [0], [1], [0, 0, 1, 1], [], []>} : vector<4x32xf32>, vector<32x32xf32>, vector<4x32xf32> -> vector<4x32xf32>
    %cst_6 = arith.constant dense<0.000000e+00> : vector<4x32xf32>
    %22 = tpu.matmul %0, %20, %cst_6 {dimension_numbers = #tpu.dot_dimension_numbers<[1], [0], [0], [1], [0, 0, 1, 1], [], []>} : vector<4x32xf32>, vector<32x32xf32>, vector<4x32xf32> -> vector<4x32xf32>
    %c0_7 = arith.constant 0 : index
    %c0_8 = arith.constant 0 : index
    %c0_9 = arith.constant 0 : index
    %23 = vector.load %arg1[%c0_7, %c0_8, %c0_9] : memref<3x8x4xf32, #tpu.memory_space<vmem>>, vector<1x8x4xf32>
    %24 = vector.shape_cast %23 : vector<1x8x4xf32> to vector<8x4xf32>
    %cst_10 = arith.constant dense<0.000000e+00> : vector<8x32xf32>
    %25 = tpu.matmul %24, %21, %cst_10 {dimension_numbers = #tpu.dot_dimension_numbers<[1], [0], [0], [1], [0, 0, 1, 1], [], []>} : vector<8x4xf32>, vector<4x32xf32>, vector<8x32xf32> -> vector<8x32xf32>
    %c1 = arith.constant 1 : index
    %c0_11 = arith.constant 0 : index
    %c0_12 = arith.constant 0 : index
    %26 = vector.load %arg1[%c1, %c0_11, %c0_12] : memref<3x8x4xf32, #tpu.memory_space<vmem>>, vector<1x8x4xf32>
    %27 = vector.shape_cast %26 : vector<1x8x4xf32> to vector<8x4xf32>
    %cst_13 = arith.constant dense<0.000000e+00> : vector<8x32xf32>
    %28 = tpu.matmul %27, %0, %cst_13 {dimension_numbers = #tpu.dot_dimension_numbers<[1], [0], [0], [1], [0, 0, 1, 1], [], []>} : vector<8x4xf32>, vector<4x32xf32>, vector<8x32xf32> -> vector<8x32xf32>
    %29 = arith.addf %25, %28 : vector<8x32xf32>
    %c2 = arith.constant 2 : index
    %c0_14 = arith.constant 0 : index
    %c0_15 = arith.constant 0 : index
    %30 = vector.load %arg1[%c2, %c0_14, %c0_15] : memref<3x8x4xf32, #tpu.memory_space<vmem>>, vector<1x8x4xf32>
    %31 = vector.shape_cast %30 : vector<1x8x4xf32> to vector<8x4xf32>
    %cst_16 = arith.constant dense<0.000000e+00> : vector<8x32xf32>
    %32 = tpu.matmul %31, %22, %cst_16 {dimension_numbers = #tpu.dot_dimension_numbers<[1], [0], [0], [1], [0, 0, 1, 1], [], []>} : vector<8x4xf32>, vector<4x32xf32>, vector<8x32xf32> -> vector<8x32xf32>
    %33 = arith.addf %29, %32 : vector<8x32xf32>
    %c0_17 = arith.constant 0 : index
    %c0_18 = arith.constant 0 : index
    %34 = vector.load %arg2[%c0_17, %c0_18] : memref<8x1xf32, #tpu.memory_space<vmem>>, vector<8x1xf32>
    %35 = vector.broadcast %34 : vector<8x1xf32> to vector<8x32xf32>
    %36 = arith.addf %33, %35 : vector<8x32xf32>
    %cst_19 = arith.constant 0.000000e+00 : f32
    %37 = vector.broadcast %cst_19 : f32 to vector<8x32xf32>
    %38 = arith.maximumf %36, %37 : vector<8x32xf32>
    %39 = tpu.iota {dimensions = array<i32: 0>} : vector<32x16xi32>
    %40 = tpu.iota {dimensions = array<i32: 1>} : vector<32x16xi32>
    %c2_i32 = arith.constant 2 : i32
    %41 = vector.broadcast %c2_i32 : i32 to vector<32x16xi32>
    %42 = arith.muli %41, %40 : vector<32x16xi32>
    %43 = arith.cmpi eq, %39, %42 : vector<32x16xi32>
    %cst_20 = arith.constant 1.000000e+00 : f32
    %cst_21 = arith.constant 0.000000e+00 : f32
    %44 = vector.broadcast %cst_20 : f32 to vector<32x16xf32>
    %45 = vector.broadcast %cst_21 : f32 to vector<32x16xf32>
    %46 = arith.select %43, %44, %45 : vector<32x16xi1>, vector<32x16xf32>
    %c2_i32_22 = arith.constant 2 : i32
    %47 = vector.broadcast %c2_i32_22 : i32 to vector<32x16xi32>
    %48 = arith.muli %47, %40 : vector<32x16xi32>
    %c1_i32_23 = arith.constant 1 : i32
    %49 = vector.broadcast %c1_i32_23 : i32 to vector<32x16xi32>
    %50 = arith.addi %48, %49 : vector<32x16xi32>
    %51 = arith.cmpi eq, %39, %50 : vector<32x16xi32>
    %cst_24 = arith.constant 1.000000e+00 : f32
    %cst_25 = arith.constant 0.000000e+00 : f32
    %52 = vector.broadcast %cst_24 : f32 to vector<32x16xf32>
    %53 = vector.broadcast %cst_25 : f32 to vector<32x16xf32>
    %54 = arith.select %51, %52, %53 : vector<32x16xi1>, vector<32x16xf32>
    %cst_26 = arith.constant dense<0.000000e+00> : vector<8x16xf32>
    %55 = tpu.matmul %38, %46, %cst_26 {dimension_numbers = #tpu.dot_dimension_numbers<[1], [0], [0], [1], [0, 0, 1, 1], [], []>} : vector<8x32xf32>, vector<32x16xf32>, vector<8x16xf32> -> vector<8x16xf32>
    %cst_27 = arith.constant dense<0.000000e+00> : vector<8x16xf32>
    %56 = tpu.matmul %38, %54, %cst_27 {dimension_numbers = #tpu.dot_dimension_numbers<[1], [0], [0], [1], [0, 0, 1, 1], [], []>} : vector<8x32xf32>, vector<32x16xf32>, vector<8x16xf32> -> vector<8x16xf32>
    %57 = arith.cmpf oge, %55, %56 : vector<8x16xf32>
    %58 = arith.select %57, %55, %56 : vector<8x16xi1>, vector<8x16xf32>
    %59 = tpu.iota {dimensions = array<i32: 1>} : vector<8x16xi32>
    %c2_i32_28 = arith.constant 2 : i32
    %60 = vector.broadcast %c2_i32_28 : i32 to vector<8x16xi32>
    %61 = arith.muli %60, %59 : vector<8x16xi32>
    %c8_i32 = arith.constant 8 : i32
    %62 = vector.broadcast %c8_i32 : i32 to vector<8x16xi32>
    %63 = arith.cmpi sge, %59, %62 : vector<8x16xi32>
    %c16_i32_29 = arith.constant 16 : i32
    %c0_i32 = arith.constant 0 : i32
    %64 = vector.broadcast %c16_i32_29 : i32 to vector<8x16xi32>
    %65 = vector.broadcast %c0_i32 : i32 to vector<8x16xi32>
    %66 = arith.select %63, %64, %65 : vector<8x16xi1>, vector<8x16xi32>
    %67 = arith.subi %61, %66 : vector<8x16xi32>
    %c1_i32_30 = arith.constant 1 : i32
    %68 = vector.broadcast %c1_i32_30 : i32 to vector<8x16xi32>
    %69 = arith.addi %67, %68 : vector<8x16xi32>
    %70 = arith.select %57, %67, %69 : vector<8x16xi1>, vector<8x16xi32>
    %71 = vector.extract_strided_slice %70 {offsets = [0, 0], sizes = [8, 8], strides = [1, 1]} : vector<8x16xi32> to vector<8x8xi32>
    %c0_31 = arith.constant 0 : index
    %c0_32 = arith.constant 0 : index
    %c0_33 = arith.constant 0 : index
    %72 = vector.load %arg6[%c0_31, %c0_32, %c0_33] : memref<2x8x8xi32, #tpu.memory_space<vmem>>, vector<1x8x8xi32>
    %73 = vector.shape_cast %72 : vector<1x8x8xi32> to vector<8x8xi32>
    %74 = vector.shape_cast %71 : vector<8x8xi32> to vector<1x8x8xi32>
    tpu.vector_store %arg6[%c0_31, %c0_32, %c0_33], %74 {strides = array<i32>} : memref<2x8x8xi32, #tpu.memory_space<vmem>>, vector<1x8x8xi32>,
    %75 = vector.extract_strided_slice %70 {offsets = [0, 8], sizes = [8, 8], strides = [1, 1]} : vector<8x16xi32> to vector<8x8xi32>
    %c1_34 = arith.constant 1 : index
    %c0_35 = arith.constant 0 : index
    %c0_36 = arith.constant 0 : index
    %76 = vector.load %arg6[%c1_34, %c0_35, %c0_36] : memref<2x8x8xi32, #tpu.memory_space<vmem>>, vector<1x8x8xi32>
    %77 = vector.shape_cast %76 : vector<1x8x8xi32> to vector<8x8xi32>
    %78 = vector.shape_cast %75 : vector<8x8xi32> to vector<1x8x8xi32>
    tpu.vector_store %arg6[%c1_34, %c0_35, %c0_36], %78 {strides = array<i32>} : memref<2x8x8xi32, #tpu.memory_space<vmem>>, vector<1x8x8xi32>,
    %79 = tpu.iota {dimensions = array<i32: 0>} : vector<16x16xi32>
    %80 = tpu.iota {dimensions = array<i32: 1>} : vector<16x16xi32>
    %c1_i32_37 = arith.constant 1 : i32
    %81 = vector.broadcast %c1_i32_37 : i32 to vector<16x16xi32>
    %82 = arith.addi %79, %81 : vector<16x16xi32>
    %83 = arith.cmpi eq, %82, %80 : vector<16x16xi32>
    %c1_i32_38 = arith.constant 1 : i32
    %84 = vector.broadcast %c1_i32_38 : i32 to vector<16x16xi32>
    %85 = arith.addi %80, %84 : vector<16x16xi32>
    %86 = arith.cmpi eq, %79, %85 : vector<16x16xi32>
    %c8_i32_39 = arith.constant 8 : i32
    %87 = vector.broadcast %c8_i32_39 : i32 to vector<16x16xi32>
    %88 = arith.cmpi ne, %80, %87 : vector<16x16xi32>
    %89 = arith.andi %83, %88 : vector<16x16xi1>
    %c7_i32 = arith.constant 7 : i32
    %90 = vector.broadcast %c7_i32 : i32 to vector<16x16xi32>
    %91 = arith.cmpi ne, %80, %90 : vector<16x16xi32>
    %92 = arith.andi %86, %91 : vector<16x16xi1>
    %cst_40 = arith.constant 1.000000e+00 : f32
    %cst_41 = arith.constant 0.000000e+00 : f32
    %93 = vector.broadcast %cst_40 : f32 to vector<16x16xf32>
    %94 = vector.broadcast %cst_41 : f32 to vector<16x16xf32>
    %95 = arith.select %89, %93, %94 : vector<16x16xi1>, vector<16x16xf32>
    %cst_42 = arith.constant 1.000000e+00 : f32
    %cst_43 = arith.constant 0.000000e+00 : f32
    %96 = vector.broadcast %cst_42 : f32 to vector<16x16xf32>
    %97 = vector.broadcast %cst_43 : f32 to vector<16x16xf32>
    %98 = arith.select %92, %96, %97 : vector<16x16xi1>, vector<16x16xf32>
    %cst_44 = arith.constant dense<0.000000e+00> : vector<8x16xf32>
    %99 = tpu.matmul %58, %95, %cst_44 {dimension_numbers = #tpu.dot_dimension_numbers<[1], [0], [0], [1], [0, 0, 1, 1], [], []>} : vector<8x16xf32>, vector<16x16xf32>, vector<8x16xf32> -> vector<8x16xf32>
    %cst_45 = arith.constant dense<0.000000e+00> : vector<8x16xf32>
    %100 = tpu.matmul %58, %98, %cst_45 {dimension_numbers = #tpu.dot_dimension_numbers<[1], [0], [0], [1], [0, 0, 1, 1], [], []>} : vector<8x16xf32>, vector<16x16xf32>, vector<8x16xf32> -> vector<8x16xf32>
    %c0_46 = arith.constant 0 : index
    %c0_47 = arith.constant 0 : index
    %c0_48 = arith.constant 0 : index
    %101 = vector.load %arg3[%c0_46, %c0_47, %c0_48] : memref<3x16x8xf32, #tpu.memory_space<vmem>>, vector<1x16x8xf32>
    %102 = vector.shape_cast %101 : vector<1x16x8xf32> to vector<16x8xf32>
    %cst_49 = arith.constant dense<0.000000e+00> : vector<16x16xf32>
    %103 = tpu.matmul %102, %99, %cst_49 {dimension_numbers = #tpu.dot_dimension_numbers<[1], [0], [0], [1], [0, 0, 1, 1], [], []>} : vector<16x8xf32>, vector<8x16xf32>, vector<16x16xf32> -> vector<16x16xf32>
    %c1_50 = arith.constant 1 : index
    %c0_51 = arith.constant 0 : index
    %c0_52 = arith.constant 0 : index
    %104 = vector.load %arg3[%c1_50, %c0_51, %c0_52] : memref<3x16x8xf32, #tpu.memory_space<vmem>>, vector<1x16x8xf32>
    %105 = vector.shape_cast %104 : vector<1x16x8xf32> to vector<16x8xf32>
    %cst_53 = arith.constant dense<0.000000e+00> : vector<16x16xf32>
    %106 = tpu.matmul %105, %58, %cst_53 {dimension_numbers = #tpu.dot_dimension_numbers<[1], [0], [0], [1], [0, 0, 1, 1], [], []>} : vector<16x8xf32>, vector<8x16xf32>, vector<16x16xf32> -> vector<16x16xf32>
    %107 = arith.addf %103, %106 : vector<16x16xf32>
    %c2_54 = arith.constant 2 : index
    %c0_55 = arith.constant 0 : index
    %c0_56 = arith.constant 0 : index
    %108 = vector.load %arg3[%c2_54, %c0_55, %c0_56] : memref<3x16x8xf32, #tpu.memory_space<vmem>>, vector<1x16x8xf32>
    %109 = vector.shape_cast %108 : vector<1x16x8xf32> to vector<16x8xf32>
    %cst_57 = arith.constant dense<0.000000e+00> : vector<16x16xf32>
    %110 = tpu.matmul %109, %100, %cst_57 {dimension_numbers = #tpu.dot_dimension_numbers<[1], [0], [0], [1], [0, 0, 1, 1], [], []>} : vector<16x8xf32>, vector<8x16xf32>, vector<16x16xf32> -> vector<16x16xf32>
    %111 = arith.addf %107, %110 : vector<16x16xf32>
    %c0_58 = arith.constant 0 : index
    %c0_59 = arith.constant 0 : index
    %112 = vector.load %arg4[%c0_58, %c0_59] : memref<16x1xf32, #tpu.memory_space<vmem>>, vector<16x1xf32>
    %113 = vector.broadcast %112 : vector<16x1xf32> to vector<16x16xf32>
    %114 = arith.addf %111, %113 : vector<16x16xf32>
    %cst_60 = arith.constant 0.000000e+00 : f32
    %115 = vector.broadcast %cst_60 : f32 to vector<16x16xf32>
    %116 = arith.maximumf %114, %115 : vector<16x16xf32>
    %117 = tpu.iota {dimensions = array<i32: 0>} : vector<16x8xi32>
    %118 = tpu.iota {dimensions = array<i32: 1>} : vector<16x8xi32>
    %c2_i32_61 = arith.constant 2 : i32
    %119 = vector.broadcast %c2_i32_61 : i32 to vector<16x8xi32>
    %120 = arith.muli %119, %118 : vector<16x8xi32>
    %121 = arith.cmpi eq, %117, %120 : vector<16x8xi32>
    %cst_62 = arith.constant 1.000000e+00 : f32
    %cst_63 = arith.constant 0.000000e+00 : f32
    %122 = vector.broadcast %cst_62 : f32 to vector<16x8xf32>
    %123 = vector.broadcast %cst_63 : f32 to vector<16x8xf32>
    %124 = arith.select %121, %122, %123 : vector<16x8xi1>, vector<16x8xf32>
    %c2_i32_64 = arith.constant 2 : i32
    %125 = vector.broadcast %c2_i32_64 : i32 to vector<16x8xi32>
    %126 = arith.muli %125, %118 : vector<16x8xi32>
    %c1_i32_65 = arith.constant 1 : i32
    %127 = vector.broadcast %c1_i32_65 : i32 to vector<16x8xi32>
    %128 = arith.addi %126, %127 : vector<16x8xi32>
    %129 = arith.cmpi eq, %117, %128 : vector<16x8xi32>
    %cst_66 = arith.constant 1.000000e+00 : f32
    %cst_67 = arith.constant 0.000000e+00 : f32
    %130 = vector.broadcast %cst_66 : f32 to vector<16x8xf32>
    %131 = vector.broadcast %cst_67 : f32 to vector<16x8xf32>
    %132 = arith.select %129, %130, %131 : vector<16x8xi1>, vector<16x8xf32>
    %cst_68 = arith.constant dense<0.000000e+00> : vector<16x8xf32>
    %133 = tpu.matmul %116, %124, %cst_68 {dimension_numbers = #tpu.dot_dimension_numbers<[1], [0], [0], [1], [0, 0, 1, 1], [], []>} : vector<16x16xf32>, vector<16x8xf32>, vector<16x8xf32> -> vector<16x8xf32>
    %cst_69 = arith.constant dense<0.000000e+00> : vector<16x8xf32>
    %134 = tpu.matmul %116, %132, %cst_69 {dimension_numbers = #tpu.dot_dimension_numbers<[1], [0], [0], [1], [0, 0, 1, 1], [], []>} : vector<16x16xf32>, vector<16x8xf32>, vector<16x8xf32> -> vector<16x8xf32>
    %135 = arith.cmpf oge, %133, %134 : vector<16x8xf32>
    %136 = arith.select %135, %133, %134 : vector<16x8xi1>, vector<16x8xf32>
    %137 = tpu.iota {dimensions = array<i32: 1>} : vector<16x8xi32>
    %c2_i32_70 = arith.constant 2 : i32
    %138 = vector.broadcast %c2_i32_70 : i32 to vector<16x8xi32>
    %139 = arith.muli %138, %137 : vector<16x8xi32>
    %c4_i32 = arith.constant 4 : i32
    %140 = vector.broadcast %c4_i32 : i32 to vector<16x8xi32>
    %141 = arith.cmpi sge, %137, %140 : vector<16x8xi32>
    %c8_i32_71 = arith.constant 8 : i32
    %c0_i32_72 = arith.constant 0 : i32
    %142 = vector.broadcast %c8_i32_71 : i32 to vector<16x8xi32>
    %143 = vector.broadcast %c0_i32_72 : i32 to vector<16x8xi32>
    %144 = arith.select %141, %142, %143 : vector<16x8xi1>, vector<16x8xi32>
    %145 = arith.subi %139, %144 : vector<16x8xi32>
    %c1_i32_73 = arith.constant 1 : i32
    %146 = vector.broadcast %c1_i32_73 : i32 to vector<16x8xi32>
    %147 = arith.addi %145, %146 : vector<16x8xi32>
    %148 = arith.select %135, %145, %147 : vector<16x8xi1>, vector<16x8xi32>
    %149 = vector.extract_strided_slice %148 {offsets = [0, 0], sizes = [16, 4], strides = [1, 1]} : vector<16x8xi32> to vector<16x4xi32>
    %c0_74 = arith.constant 0 : index
    %c0_75 = arith.constant 0 : index
    %c0_76 = arith.constant 0 : index
    %150 = vector.load %arg7[%c0_74, %c0_75, %c0_76] : memref<2x16x4xi32, #tpu.memory_space<vmem>>, vector<1x16x4xi32>
    %151 = vector.shape_cast %150 : vector<1x16x4xi32> to vector<16x4xi32>
    %152 = vector.shape_cast %149 : vector<16x4xi32> to vector<1x16x4xi32>
    tpu.vector_store %arg7[%c0_74, %c0_75, %c0_76], %152 {strides = array<i32>} : memref<2x16x4xi32, #tpu.memory_space<vmem>>, vector<1x16x4xi32>,
    %153 = vector.extract_strided_slice %148 {offsets = [0, 4], sizes = [16, 4], strides = [1, 1]} : vector<16x8xi32> to vector<16x4xi32>
    %c1_77 = arith.constant 1 : index
    %c0_78 = arith.constant 0 : index
    %c0_79 = arith.constant 0 : index
    %154 = vector.load %arg7[%c1_77, %c0_78, %c0_79] : memref<2x16x4xi32, #tpu.memory_space<vmem>>, vector<1x16x4xi32>
    %155 = vector.shape_cast %154 : vector<1x16x4xi32> to vector<16x4xi32>
    %156 = vector.shape_cast %153 : vector<16x4xi32> to vector<1x16x4xi32>
    tpu.vector_store %arg7[%c1_77, %c0_78, %c0_79], %156 {strides = array<i32>} : memref<2x16x4xi32, #tpu.memory_space<vmem>>, vector<1x16x4xi32>,
    %157 = vector.extract_strided_slice %136 {offsets = [0, 0], sizes = [16, 4], strides = [1, 1]} : vector<16x8xf32> to vector<16x4xf32>
    %c0_80 = arith.constant 0 : index
    %c0_81 = arith.constant 0 : index
    %c0_82 = arith.constant 0 : index
    %158 = vector.load %arg5[%c0_80, %c0_81, %c0_82] : memref<2x16x4xf32, #tpu.memory_space<vmem>>, vector<1x16x4xf32>
    %159 = vector.shape_cast %158 : vector<1x16x4xf32> to vector<16x4xf32>
    %160 = vector.shape_cast %157 : vector<16x4xf32> to vector<1x16x4xf32>
    tpu.vector_store %arg5[%c0_80, %c0_81, %c0_82], %160 {strides = array<i32>} : memref<2x16x4xf32, #tpu.memory_space<vmem>>, vector<1x16x4xf32>,
    %161 = vector.extract_strided_slice %136 {offsets = [0, 4], sizes = [16, 4], strides = [1, 1]} : vector<16x8xf32> to vector<16x4xf32>
    %c1_83 = arith.constant 1 : index
    %c0_84 = arith.constant 0 : index
    %c0_85 = arith.constant 0 : index
    %162 = vector.load %arg5[%c1_83, %c0_84, %c0_85] : memref<2x16x4xf32, #tpu.memory_space<vmem>>, vector<1x16x4xf32>
    %163 = vector.shape_cast %162 : vector<1x16x4xf32> to vector<16x4xf32>
    %164 = vector.shape_cast %161 : vector<16x4xf32> to vector<1x16x4xf32>
    tpu.vector_store %arg5[%c1_83, %c0_84, %c0_85], %164 {strides = array<i32>} : memref<2x16x4xf32, #tpu.memory_space<vmem>>, vector<1x16x4xf32>,
    return
  }
}

</mosaic_0001>

<llo_original>
// kernel: x_enc_forward.1
$region0: #{x_enc_forward.1}
  #allocation0 [shape = 'u32[]', space=smem, size = 0x4, offset = 0x4, fixed_abs, tag = 'smem constant byte address 0x4 - core index']
  #allocation1 [shape = 'u32[144,128]{1,0:T(1,128)}', space=vmem, size = 0x12000, scoped, tag = 'internal scratch']
  %s0 = inlined_call_operand.vmem [shape: f32[4,32], index: 0, kind: input, shape index: {}]
  %s1 = inlined_call_operand.vmem [shape: f32[3,8,4], index: 1, kind: input, shape index: {}]
  %s2 = inlined_call_operand.vmem [shape: f32[8,1], index: 2, kind: input, shape index: {}]
  %s3 = inlined_call_operand.vmem [shape: f32[3,16,8], index: 3, kind: input, shape index: {}]
  %s4 = inlined_call_operand.vmem [shape: f32[16,1], index: 4, kind: input, shape index: {}]
  %s5 = inlined_call_operand.vmem [shape: f32[2,16,4], index: 5, kind: output, shape index: {0}]
  %s6 = inlined_call_operand.hbm [shape: s32[2,8,8], index: 6, kind: output, shape index: {1}]
  %s7 = inlined_call_operand.vmem [shape: s32[2,16,4], index: 7, kind: output, shape index: {2}]
  %8 = xla_tuple %s5, %s6, %s7
  %s9 = sld [smem:[#allocation0]]
  $region46: #{x_enc_forward.1} parent=0
    _
  %s11 = ssub.s32 1, %s9
  %s12 = scalar_select 0, %s11, %s9
  $region1: #{x_enc_forward.1} parent=0
    #allocation2 [shape = 'u8[8192]{0}', space=vmem, size = 0x2000, scoped, tag = 'output window, operand 1, single buffered']
    #allocation3 [shape = 's32[1]{0}', space=sflag, size = 0x4, scoped, tag = 'scoped memory for x_enc_forward.1']
    %13 = vsyncpa [#allocation3], 0
    // Predicated region
    $region2: #{x_enc_forward.1} parent=1 // pred_check
      _
    $region3: #{x_enc_forward.1} parent=1 // pred_check_branch
      %15 = sbr.rel (0) target = $region5
    $region4: #{x_enc_forward.1} parent=1 // pred_region
      _
    $region5: #{x_enc_forward.1} parent=1 // pred_fallthru
      _
    // Predicated region
    $region6: #{x_enc_forward.1} parent=1 // pred_check
      _
    $region7: #{x_enc_forward.1} parent=1 // pred_check_branch
      %17 = sbr.rel (0) target = $region9
    $region8: #{x_enc_forward.1} parent=1 // pred_region
      _
    $region9: #{x_enc_forward.1} parent=1 // pred_fallthru
      _
    // Predicated region
    $region10: #{x_enc_forward.1} parent=1 // pred_check
      _
    $region11: #{x_enc_forward.1} parent=1 // pred_check_branch
      %19 = sbr.rel (0) target = $region13
    $region12: #{x_enc_forward.1} parent=1 // pred_region
      _
    $region13: #{x_enc_forward.1} parent=1 // pred_fallthru
      _
    // Predicated region
    $region14: #{x_enc_forward.1} parent=1 // pred_check
      _
    $region15: #{x_enc_forward.1} parent=1 // pred_check_branch
      %21 = sbr.rel (0) target = $region17
    $region16: #{x_enc_forward.1} parent=1 // pred_region
      _
    $region17: #{x_enc_forward.1} parent=1 // pred_fallthru
      _
    // Predicated region
    $region18: #{x_enc_forward.1} parent=1 // pred_check
      _
    $region19: #{x_enc_forward.1} parent=1 // pred_check_branch
      %23 = sbr.rel (0) target = $region21
    $region20: #{x_enc_forward.1} parent=1 // pred_region
      _
    $region21: #{x_enc_forward.1} parent=1 // pred_fallthru
      _
    %v24 = vld [vmem:[%s0] sm:$0xf]
    %v25 = vlaneseq
    %v26 = vshrl.u32 %v25, 7
    %v27 = vadd.s32 %v26, 8
    %v28 = vadd.s32 %v26, 16
    %v29 = vadd.s32 %v26, 24
    %v30 = vlaneseq
    %v31 = vand.u32 %v30, 127
    %v32 = vadd.s32 %v26, 1
    %v33 = vadd.s32 %v27, 1
    %v34 = vadd.s32 %v28, 1
    %v35 = vadd.s32 %v29, 1
    %vm36 = vcmp.eq.s32.totalorder %v32, %v31
    %vm37 = vcmp.eq.s32.totalorder %v33, %v31
    %vm38 = vcmp.eq.s32.totalorder %v34, %v31
    %vm39 = vcmp.eq.s32.totalorder %v35, %v31
    %v40 = vadd.s32 %v31, 1
    %vm41 = vcmp.eq.s32.totalorder %v26, %v40
    %vm42 = vcmp.eq.s32.totalorder %v27, %v40
    %vm43 = vcmp.eq.s32.totalorder %v28, %v40
    %vm44 = vcmp.eq.s32.totalorder %v29, %v40
    %vm45 = vcmp.ne.s32.totalorder %v31, 16
    %vm46 = vmand %vm36, %vm45
    %vm47 = vmand %vm37, %vm45
    %vm48 = vmand %vm38, %vm45
    %vm49 = vmand %vm39, %vm45
    %vm50 = vcmp.ne.s32.totalorder %v31, 15
    %vm51 = vmand %vm41, %vm50
    %vm52 = vmand %vm42, %vm50
    %vm53 = vmand %vm43, %vm50
    %vm54 = vmand %vm44, %vm50
    %v55 = vsel %vm46, 1.0, 0.0
    %v56 = vsel %vm47, 1.0, 0.0
    %v57 = vsel %vm48, 1.0, 0.0
    %v58 = vsel %vm49, 1.0, 0.0
    %v59 = vsel %vm51, 1.0, 0.0
    %v60 = vsel %vm52, 1.0, 0.0
    %v61 = vsel %vm53, 1.0, 0.0
    %v62 = vsel %vm54, 1.0, 0.0
    %vm63 = vcmask 261120
    %v65 = vsel %vm63, %v24, 0
    %67 = vmatprep.subr.mxu0 0.0
    %68 = vmatpush1.msra.mxu0 %v55
    %69 = vmatprep.subr.mxu0 0.0
    %70 = vmatpush1.msra.mxu0 %v56
    %71 = vmatprep.subr.mxu0 0.0
    %72 = vmatpush1.msra.mxu0 %v57
    %73 = vmatprep.subr.mxu0 0.0
    %74 = vmatpush1.msra.mxu0 %v58
    %75 = vmatprep.subr.mxu0 0.0
    %76 = vmatpush1.msra.mxu0 0.0
    %77 = vmatprep.subr.mxu0 0.0
    %78 = vmatpush1.msra.mxu0 0.0
    %79 = vmatprep.subr.mxu0 0.0
    %80 = vmatpush1.msra.mxu0 0.0
    %81 = vmatprep.subr.mxu0 0.0
    %82 = vmatpush1.msra.mxu0 0.0
    %83 = vmatprep.subr.mxu0 0.0
    %84 = vmatpush1.msra.mxu0 0.0
    %85 = vmatprep.subr.mxu0 0.0
    %86 = vmatpush1.msra.mxu0 0.0
    %87 = vmatprep.subr.mxu0 0.0
    %88 = vmatpush1.msra.mxu0 0.0
    %89 = vmatprep.subr.mxu0 0.0
    %90 = vmatpush1.msra.mxu0 0.0
    %91 = vmatprep.subr.mxu0 0.0
    %92 = vmatpush1.msra.mxu0 0.0
    %93 = vmatprep.subr.mxu0 0.0
    %94 = vmatpush1.msra.mxu0 0.0
    %95 = vmatprep.subr.mxu0 0.0
    %96 = vmatpush1.msra.mxu0 0.0
    %97 = vmatprep.subr.mxu0 0.0
    %98 = vmatpush1.msra.mxu0 0.0
    %99 = vmatprep.subr.mxu0 0.0
    %100 = vmatpush1.msra.mxu0 0.0
    %101 = vmatprep.subr.mxu0 0.0
    %102 = vmatpush1.msra.mxu0 0.0
    %103 = vmatprep.subr.mxu0 0.0
    %104 = vmatpush1.msra.mxu0 0.0
    %105 = vmatprep.subr.mxu0 0.0
    %106 = vmatpush1.msra.mxu0 0.0
    %107 = vmatprep.subr.mxu0 0.0
    %108 = vmatpush1.msra.mxu0 0.0
    %109 = vmatprep.subr.mxu0 0.0
    %110 = vmatpush1.msra.mxu0 0.0
    %111 = vmatprep.subr.mxu0 0.0
    %112 = vmatpush1.msra.mxu0 0.0
    %113 = vmatprep.subr.mxu0 0.0
    %114 = vmatpush1.msra.mxu0 0.0
    %115 = vmatprep.subr.mxu0 0.0
    %116 = vmatpush1.msra.mxu0 0.0
    %117 = vmatprep.subr.mxu0 0.0
    %118 = vmatpush1.msra.mxu0 0.0
    %119 = vmatprep.subr.mxu0 0.0
    %120 = vmatpush1.msra.mxu0 0.0
    %121 = vmatprep.subr.mxu0 0.0
    %122 = vmatpush1.msra.mxu0 0.0
    %123 = vmatprep.subr.mxu0 0.0
    %124 = vmatpush1.msra.mxu0 0.0
    %125 = vmatprep.subr.mxu0 0.0
    %126 = vmatpush1.msra.mxu0 0.0
    %127 = vmatprep.subr.mxu0 0.0
    %128 = vmatpush1.msra.mxu0 0.0
    %129 = vmatprep.subr.mxu0 0.0
    %130 = vmatpush1.msra.mxu0 0.0
    %131 = vmatprep.mubr.f32.mxu0 0.0
    %132 = vmatmul.mubr.f32.gmra.mrb[0].mxu0 %v65
    %v133 = vpop.f32.mrb[0].mxu0
    %v134 = vadd.f32 0.0, %v133
    %v135 = vpop.f32.mrb[0].mxu0
    %136 = vdwg.mxu0
    %137 = vmatprep.subr.mxu0 0.0
    %138 = vmatpush1.msra.mxu0 %v59
    %139 = vmatprep.subr.mxu0 0.0
    %140 = vmatpush1.msra.mxu0 %v60
    %141 = vmatprep.subr.mxu0 0.0
    %142 = vmatpush1.msra.mxu0 %v61
    %143 = vmatprep.subr.mxu0 0.0
    %144 = vmatpush1.msra.mxu0 %v62
    %145 = vmatprep.subr.mxu0 0.0
    %146 = vmatpush1.msra.mxu0 0.0
    %147 = vmatprep.subr.mxu0 0.0
    %148 = vmatpush1.msra.mxu0 0.0
    %149 = vmatprep.subr.mxu0 0.0
    %150 = vmatpush1.msra.mxu0 0.0
    %151 = vmatprep.subr.mxu0 0.0
    %152 = vmatpush1.msra.mxu0 0.0
    %153 = vmatprep.subr.mxu0 0.0
    %154 = vmatpush1.msra.mxu0 0.0
    %155 = vmatprep.subr.mxu0 0.0
    %156 = vmatpush1.msra.mxu0 0.0
    %157 = vmatprep.subr.mxu0 0.0
    %158 = vmatpush1.msra.mxu0 0.0
    %159 = vmatprep.subr.mxu0 0.0
    %160 = vmatpush1.msra.mxu0 0.0
    %161 = vmatprep.subr.mxu0 0.0
    %162 = vmatpush1.msra.mxu0 0.0
    %163 = vmatprep.subr.mxu0 0.0
    %164 = vmatpush1.msra.mxu0 0.0
    %165 = vmatprep.subr.mxu0 0.0
    %166 = vmatpush1.msra.mxu0 0.0
    %167 = vmatprep.subr.mxu0 0.0
    %168 = vmatpush1.msra.mxu0 0.0
    %169 = vmatprep.subr.mxu0 0.0
    %170 = vmatpush1.msra.mxu0 0.0
    %171 = vmatprep.subr.mxu0 0.0
    %172 = vmatpush1.msra.mxu0 0.0
    %173 = vmatprep.subr.mxu0 0.0
    %174 = vmatpush1.msra.mxu0 0.0
    %175 = vmatprep.subr.mxu0 0.0
    %176 = vmatpush1.msra.mxu0 0.0
    %177 = vmatprep.subr.mxu0 0.0
    %178 = vmatpush1.msra.mxu0 0.0
    %179 = vmatprep.subr.mxu0 0.0
    %180 = vmatpush1.msra.mxu0 0.0
    %181 = vmatprep.subr.mxu0 0.0
    %182 = vmatpush1.msra.mxu0 0.0
    %183 = vmatprep.subr.mxu0 0.0
    %184 = vmatpush1.msra.mxu0 0.0
    %185 = vmatprep.subr.mxu0 0.0
    %186 = vmatpush1.msra.mxu0 0.0
    %187 = vmatprep.subr.mxu0 0.0
    %188 = vmatpush1.msra.mxu0 0.0
    %189 = vmatprep.subr.mxu0 0.0
    %190 = vmatpush1.msra.mxu0 0.0
    %191 = vmatprep.subr.mxu0 0.0
    %192 = vmatpush1.msra.mxu0 0.0
    %193 = vmatprep.subr.mxu0 0.0
    %194 = vmatpush1.msra.mxu0 0.0
    %195 = vmatprep.subr.mxu0 0.0
    %196 = vmatpush1.msra.mxu0 0.0
    %197 = vmatprep.subr.mxu0 0.0
    %198 = vmatpush1.msra.mxu0 0.0
    %199 = vmatprep.subr.mxu0 0.0
    %200 = vmatpush1.msra.mxu0 0.0
    %201 = vmatprep.mubr.f32.mxu0 0.0
    %202 = vmatmul.mubr.f32.gmra.mrb[0].mxu0 %v65
    %v203 = vpop.f32.mrb[0].mxu0
    %v204 = vadd.f32 0.0, %v203
    %v205 = vpop.f32.mrb[0].mxu0
    %206 = vdwg.mxu0
    %v207 = vld [vmem:[%s1] sm:$0xff]
    %s208 = scalar_lea.vmem %s1, 8
    %v209 = vld [vmem:[%s208] sm:$0xff]
    %vm210 = vcmask 31744
    %v212 = vsel %vm210, %v209, 0
    %vm214 = vcmask 1043456
    %v215 = vsel %vm214, %v24, 0
    %217 = vmatprep.subr.mxu0 0.0
    %218 = vmatpush1.msra.mxu0 %v215
    %219 = vmatprep.subr.mxu0 0.0
    %220 = vmatpush1.msra.mxu0 0.0
    %221 = vmatprep.subr.mxu0 0.0
    %222 = vmatpush1.msra.mxu0 0.0
    %223 = vmatprep.subr.mxu0 0.0
    %224 = vmatpush1.msra.mxu0 0.0
    %225 = vmatprep.subr.mxu0 0.0
    %226 = vmatpush1.msra.mxu0 0.0
    %227 = vmatprep.subr.mxu0 0.0
    %228 = vmatpush1.msra.mxu0 0.0
    %229 = vmatprep.subr.mxu0 0.0
    %230 = vmatpush1.msra.mxu0 0.0
    %231 = vmatprep.subr.mxu0 0.0
    %232 = vmatpush1.msra.mxu0 0.0
    %233 = vmatprep.subr.mxu0 0.0
    %234 = vmatpush1.msra.mxu0 0.0
    %235 = vmatprep.subr.mxu0 0.0
    %236 = vmatpush1.msra.mxu0 0.0
    %237 = vmatprep.subr.mxu0 0.0
    %238 = vmatpush1.msra.mxu0 0.0
    %239 = vmatprep.subr.mxu0 0.0
    %240 = vmatpush1.msra.mxu0 0.0
    %241 = vmatprep.subr.mxu0 0.0
    %242 = vmatpush1.msra.mxu0 0.0
    %243 = vmatprep.subr.mxu0 0.0
    %244 = vmatpush1.msra.mxu0 0.0
    %245 = vmatprep.subr.mxu0 0.0
    %246 = vmatpush1.msra.mxu0 0.0
    %247 = vmatprep.subr.mxu0 0.0
    %248 = vmatpush1.msra.mxu0 0.0
    %249 = vmatprep.subr.mxu0 0.0
    %250 = vmatpush1.msra.mxu0 0.0
    %251 = vmatprep.subr.mxu0 0.0
    %252 = vmatpush1.msra.mxu0 0.0
    %253 = vmatprep.subr.mxu0 0.0
    %254 = vmatpush1.msra.mxu0 0.0
    %255 = vmatprep.subr.mxu0 0.0
    %256 = vmatpush1.msra.mxu0 0.0
    %257 = vmatprep.subr.mxu0 0.0
    %258 = vmatpush1.msra.mxu0 0.0
    %259 = vmatprep.subr.mxu0 0.0
    %260 = vmatpush1.msra.mxu0 0.0
    %261 = vmatprep.subr.mxu0 0.0
    %262 = vmatpush1.msra.mxu0 0.0
    %263 = vmatprep.subr.mxu0 0.0
    %264 = vmatpush1.msra.mxu0 0.0
    %265 = vmatprep.subr.mxu0 0.0
    %266 = vmatpush1.msra.mxu0 0.0
    %267 = vmatprep.subr.mxu0 0.0
    %268 = vmatpush1.msra.mxu0 0.0
    %269 = vmatprep.subr.mxu0 0.0
    %270 = vmatpush1.msra.mxu0 0.0
    %271 = vmatprep.subr.mxu0 0.0
    %272 = vmatpush1.msra.mxu0 0.0
    %273 = vmatprep.subr.mxu0 0.0
    %274 = vmatpush1.msra.mxu0 0.0
    %275 = vmatprep.subr.mxu0 0.0
    %276 = vmatpush1.msra.mxu0 0.0
    %277 = vmatprep.subr.mxu0 0.0
    %278 = vmatpush1.msra.mxu0 0.0
    %279 = vmatprep.subr.mxu0 0.0
    %280 = vmatpush1.msra.mxu0 0.0
    %281 = vmatprep.mubr.f32.mxu0 0.0
    %282 = vmatmul.mubr.f32.gmra.mrb[0].mxu0 %v212
    %v283 = vpop.f32.mrb[0].mxu0
    %v284 = vadd.f32 0.0, %v283
    %v285 = vpop.f32.mrb[0].mxu0
    %286 = vdwg.mxu0
    %v288 = vsel %vm210, %v207, 0
    %v291 = vsel %vm214, %v134, 0
    %293 = vmatprep.subr.mxu0 0.0
    %294 = vmatpush1.msra.mxu0 %v291
    %295 = vmatprep.subr.mxu0 0.0
    %296 = vmatpush1.msra.mxu0 0.0
    %297 = vmatprep.subr.mxu0 0.0
    %298 = vmatpush1.msra.mxu0 0.0
    %299 = vmatprep.subr.mxu0 0.0
    %300 = vmatpush1.msra.mxu0 0.0
    %301 = vmatprep.subr.mxu0 0.0
    %302 = vmatpush1.msra.mxu0 0.0
    %303 = vmatprep.subr.mxu0 0.0
    %304 = vmatpush1.msra.mxu0 0.0
    %305 = vmatprep.subr.mxu0 0.0
    %306 = vmatpush1.msra.mxu0 0.0
    %307 = vmatprep.subr.mxu0 0.0
    %308 = vmatpush1.msra.mxu0 0.0
    %309 = vmatprep.subr.mxu0 0.0
    %310 = vmatpush1.msra.mxu0 0.0
    %311 = vmatprep.subr.mxu0 0.0
    %312 = vmatpush1.msra.mxu0 0.0
    %313 = vmatprep.subr.mxu0 0.0
    %314 = vmatpush1.msra.mxu0 0.0
    %315 = vmatprep.subr.mxu0 0.0
    %316 = vmatpush1.msra.mxu0 0.0
    %317 = vmatprep.subr.mxu0 0.0
    %318 = vmatpush1.msra.mxu0 0.0
    %319 = vmatprep.subr.mxu0 0.0
    %320 = vmatpush1.msra.mxu0 0.0
    %321 = vmatprep.subr.mxu0 0.0
    %322 = vmatpush1.msra.mxu0 0.0
    %323 = vmatprep.subr.mxu0 0.0
    %324 = vmatpush1.msra.mxu0 0.0
    %325 = vmatprep.subr.mxu0 0.0
    %326 = vmatpush1.msra.mxu0 0.0
    %327 = vmatprep.subr.mxu0 0.0
    %328 = vmatpush1.msra.mxu0 0.0
    %329 = vmatprep.subr.mxu0 0.0
    %330 = vmatpush1.msra.mxu0 0.0
    %331 = vmatprep.subr.mxu0 0.0
    %332 = vmatpush1.msra.mxu0 0.0
    %333 = vmatprep.subr.mxu0 0.0
    %334 = vmatpush1.msra.mxu0 0.0
    %335 = vmatprep.subr.mxu0 0.0
    %336 = vmatpush1.msra.mxu0 0.0
    %337 = vmatprep.subr.mxu0 0.0
    %338 = vmatpush1.msra.mxu0 0.0
    %339 = vmatprep.subr.mxu0 0.0
    %340 = vmatpush1.msra.mxu0 0.0
    %341 = vmatprep.subr.mxu0 0.0
    %342 = vmatpush1.msra.mxu0 0.0
    %343 = vmatprep.subr.mxu0 0.0
    %344 = vmatpush1.msra.mxu0 0.0
    %345 = vmatprep.subr.mxu0 0.0
    %346 = vmatpush1.msra.mxu0 0.0
    %347 = vmatprep.subr.mxu0 0.0
    %348 = vmatpush1.msra.mxu0 0.0
    %349 = vmatprep.subr.mxu0 0.0
    %350 = vmatpush1.msra.mxu0 0.0
    %351 = vmatprep.subr.mxu0 0.0
    %352 = vmatpush1.msra.mxu0 0.0
    %353 = vmatprep.subr.mxu0 0.0
    %354 = vmatpush1.msra.mxu0 0.0
    %355 = vmatprep.subr.mxu0 0.0
    %356 = vmatpush1.msra.mxu0 0.0
    %357 = vmatprep.mubr.f32.mxu0 0.0
    %358 = vmatmul.mubr.f32.gmra.mrb[0].mxu0 %v288
    %v359 = vpop.f32.mrb[0].mxu0
    %v360 = vadd.f32 %v284, %v359
    %v361 = vpop.f32.mrb[0].mxu0
    %362 = vdwg.mxu0
    %s363 = scalar_lea.vmem %s1, 16
    %v364 = vld [vmem:[%s363] sm:$0xff]
    %v366 = vsel %vm210, %v364, 0
    %v369 = vsel %vm214, %v204, 0
    %371 = vmatprep.subr.mxu0 0.0
    %372 = vmatpush1.msra.mxu0 %v369
    %373 = vmatprep.subr.mxu0 0.0
    %374 = vmatpush1.msra.mxu0 0.0
    %375 = vmatprep.subr.mxu0 0.0
    %376 = vmatpush1.msra.mxu0 0.0
    %377 = vmatprep.subr.mxu0 0.0
    %378 = vmatpush1.msra.mxu0 0.0
    %379 = vmatprep.subr.mxu0 0.0
    %380 = vmatpush1.msra.mxu0 0.0
    %381 = vmatprep.subr.mxu0 0.0
    %382 = vmatpush1.msra.mxu0 0.0
    %383 = vmatprep.subr.mxu0 0.0
    %384 = vmatpush1.msra.mxu0 0.0
    %385 = vmatprep.subr.mxu0 0.0
    %386 = vmatpush1.msra.mxu0 0.0
    %387 = vmatprep.subr.mxu0 0.0
    %388 = vmatpush1.msra.mxu0 0.0
    %389 = vmatprep.subr.mxu0 0.0
    %390 = vmatpush1.msra.mxu0 0.0
    %391 = vmatprep.subr.mxu0 0.0
    %392 = vmatpush1.msra.mxu0 0.0
    %393 = vmatprep.subr.mxu0 0.0
    %394 = vmatpush1.msra.mxu0 0.0
    %395 = vmatprep.subr.mxu0 0.0
    %396 = vmatpush1.msra.mxu0 0.0
    %397 = vmatprep.subr.mxu0 0.0
    %398 = vmatpush1.msra.mxu0 0.0
    %399 = vmatprep.subr.mxu0 0.0
    %400 = vmatpush1.msra.mxu0 0.0
    %401 = vmatprep.subr.mxu0 0.0
    %402 = vmatpush1.msra.mxu0 0.0
    %403 = vmatprep.subr.mxu0 0.0
    %404 = vmatpush1.msra.mxu0 0.0
    %405 = vmatprep.subr.mxu0 0.0
    %406 = vmatpush1.msra.mxu0 0.0
    %407 = vmatprep.subr.mxu0 0.0
    %408 = vmatpush1.msra.mxu0 0.0
    %409 = vmatprep.subr.mxu0 0.0
    %410 = vmatpush1.msra.mxu0 0.0
    %411 = vmatprep.subr.mxu0 0.0
    %412 = vmatpush1.msra.mxu0 0.0
    %413 = vmatprep.subr.mxu0 0.0
    %414 = vmatpush1.msra.mxu0 0.0
    %415 = vmatprep.subr.mxu0 0.0
    %416 = vmatpush1.msra.mxu0 0.0
    %417 = vmatprep.subr.mxu0 0.0
    %418 = vmatpush1.msra.mxu0 0.0
    %419 = vmatprep.subr.mxu0 0.0
    %420 = vmatpush1.msra.mxu0 0.0
    %421 = vmatprep.subr.mxu0 0.0
    %422 = vmatpush1.msra.mxu0 0.0
    %423 = vmatprep.subr.mxu0 0.0
    %424 = vmatpush1.msra.mxu0 0.0
    %425 = vmatprep.subr.mxu0 0.0
    %426 = vmatpush1.msra.mxu0 0.0
    %427 = vmatprep.subr.mxu0 0.0
    %428 = vmatpush1.msra.mxu0 0.0
    %429 = vmatprep.subr.mxu0 0.0
    %430 = vmatpush1.msra.mxu0 0.0
    %431 = vmatprep.subr.mxu0 0.0
    %432 = vmatpush1.msra.mxu0 0.0
    %433 = vmatprep.subr.mxu0 0.0
    %434 = vmatpush1.msra.mxu0 0.0
    %435 = vmatprep.mubr.f32.mxu0 0.0
    %436 = vmatmul.mubr.f32.gmra.mrb[0].mxu0 %v366
    %v437 = vpop.f32.mrb[0].mxu0
    %v438 = vadd.f32 0.0, %v437
    %v439 = vpop.f32.mrb[0].mxu0
    %440 = vdwg.mxu0
    %v441 = vadd.f32 %v360, %v438
    %v442 = vld [vmem:[%s2] sm:$0xff]
    %444 = vset.pattern.permute.xlu0 0
    %445 = vperm.xlu0 %444, %v442
    %v446 = vpop.permute.xlu0 %445
    %v448 = vadd.f32 %v441, %v446
    %v449 = vmax.f32 %v448, 0.0
    %v450 = vmul.u32 %v31, 2
    %vm451 = vcmp.eq.s32.totalorder %v26, %v450
    %vm452 = vcmp.eq.s32.totalorder %v27, %v450
    %vm453 = vcmp.eq.s32.totalorder %v28, %v450
    %vm454 = vcmp.eq.s32.totalorder %v29, %v450
    %v455 = vsel %vm451, 1.0, 0.0
    %v456 = vsel %vm452, 1.0, 0.0
    %v457 = vsel %vm453, 1.0, 0.0
    %v458 = vsel %vm454, 1.0, 0.0
    %v459 = vadd.s32 %v450, 1
    %vm460 = vcmp.eq.s32.totalorder %v26, %v459
    %vm461 = vcmp.eq.s32.totalorder %v27, %v459
    %vm462 = vcmp.eq.s32.totalorder %v28, %v459
    %vm463 = vcmp.eq.s32.totalorder %v29, %v459
    %v464 = vsel %vm460, 1.0, 0.0
    %v465 = vsel %vm461, 1.0, 0.0
    %v466 = vsel %vm462, 1.0, 0.0
    %v467 = vsel %vm463, 1.0, 0.0
    %v469 = vsel %vm63, %v449, 0
    %471 = vmatprep.subr.mxu0 0.0
    %472 = vmatpush1.msra.mxu0 %v455
    %473 = vmatprep.subr.mxu0 0.0
    %474 = vmatpush1.msra.mxu0 %v456
    %475 = vmatprep.subr.mxu0 0.0
    %476 = vmatpush1.msra.mxu0 %v457
    %477 = vmatprep.subr.mxu0 0.0
    %478 = vmatpush1.msra.mxu0 %v458
    %479 = vmatprep.subr.mxu0 0.0
    %480 = vmatpush1.msra.mxu0 0.0
    %481 = vmatprep.subr.mxu0 0.0
    %482 = vmatpush1.msra.mxu0 0.0
    %483 = vmatprep.subr.mxu0 0.0
    %484 = vmatpush1.msra.mxu0 0.0
    %485 = vmatprep.subr.mxu0 0.0
    %486 = vmatpush1.msra.mxu0 0.0
    %487 = vmatprep.subr.mxu0 0.0
    %488 = vmatpush1.msra.mxu0 0.0
    %489 = vmatprep.subr.mxu0 0.0
    %490 = vmatpush1.msra.mxu0 0.0
    %491 = vmatprep.subr.mxu0 0.0
    %492 = vmatpush1.msra.mxu0 0.0
    %493 = vmatprep.subr.mxu0 0.0
    %494 = vmatpush1.msra.mxu0 0.0
    %495 = vmatprep.subr.mxu0 0.0
    %496 = vmatpush1.msra.mxu0 0.0
    %497 = vmatprep.subr.mxu0 0.0
    %498 = vmatpush1.msra.mxu0 0.0
    %499 = vmatprep.subr.mxu0 0.0
    %500 = vmatpush1.msra.mxu0 0.0
    %501 = vmatprep.subr.mxu0 0.0
    %502 = vmatpush1.msra.mxu0 0.0
    %503 = vmatprep.subr.mxu0 0.0
    %504 = vmatpush1.msra.mxu0 0.0
    %505 = vmatprep.subr.mxu0 0.0
    %506 = vmatpush1.msra.mxu0 0.0
    %507 = vmatprep.subr.mxu0 0.0
    %508 = vmatpush1.msra.mxu0 0.0
    %509 = vmatprep.subr.mxu0 0.0
    %510 = vmatpush1.msra.mxu0 0.0
    %511 = vmatprep.subr.mxu0 0.0
    %512 = vmatpush1.msra.mxu0 0.0
    %513 = vmatprep.subr.mxu0 0.0
    %514 = vmatpush1.msra.mxu0 0.0
    %515 = vmatprep.subr.mxu0 0.0
    %516 = vmatpush1.msra.mxu0 0.0
    %517 = vmatprep.subr.mxu0 0.0
    %518 = vmatpush1.msra.mxu0 0.0
    %519 = vmatprep.subr.mxu0 0.0
    %520 = vmatpush1.msra.mxu0 0.0
    %521 = vmatprep.subr.mxu0 0.0
    %522 = vmatpush1.msra.mxu0 0.0
    %523 = vmatprep.subr.mxu0 0.0
    %524 = vmatpush1.msra.mxu0 0.0
    %525 = vmatprep.subr.mxu0 0.0
    %526 = vmatpush1.msra.mxu0 0.0
    %527 = vmatprep.subr.mxu0 0.0
    %528 = vmatpush1.msra.mxu0 0.0
    %529 = vmatprep.subr.mxu0 0.0
    %530 = vmatpush1.msra.mxu0 0.0
    %531 = vmatprep.subr.mxu0 0.0
    %532 = vmatpush1.msra.mxu0 0.0
    %533 = vmatprep.subr.mxu0 0.0
    %534 = vmatpush1.msra.mxu0 0.0
    %535 = vmatprep.mubr.f32.mxu0 0.0
    %536 = vmatmul.mubr.f32.gmra.mrb[0].mxu0 %v469
    %v537 = vpop.f32.mrb[0].mxu0
    %v538 = vadd.f32 0.0, %v537
    %v539 = vpop.f32.mrb[0].mxu0
    %540 = vdwg.mxu0
    %541 = vmatprep.subr.mxu0 0.0
    %542 = vmatpush1.msra.mxu0 %v464
    %543 = vmatprep.subr.mxu0 0.0
    %544 = vmatpush1.msra.mxu0 %v465
    %545 = vmatprep.subr.mxu0 0.0
    %546 = vmatpush1.msra.mxu0 %v466
    %547 = vmatprep.subr.mxu0 0.0
    %548 = vmatpush1.msra.mxu0 %v467
    %549 = vmatprep.subr.mxu0 0.0
    %550 = vmatpush1.msra.mxu0 0.0
    %551 = vmatprep.subr.mxu0 0.0
    %552 = vmatpush1.msra.mxu0 0.0
    %553 = vmatprep.subr.mxu0 0.0
    %554 = vmatpush1.msra.mxu0 0.0
    %555 = vmatprep.subr.mxu0 0.0
    %556 = vmatpush1.msra.mxu0 0.0
    %557 = vmatprep.subr.mxu0 0.0
    %558 = vmatpush1.msra.mxu0 0.0
    %559 = vmatprep.subr.mxu0 0.0
    %560 = vmatpush1.msra.mxu0 0.0
    %561 = vmatprep.subr.mxu0 0.0
    %562 = vmatpush1.msra.mxu0 0.0
    %563 = vmatprep.subr.mxu0 0.0
    %564 = vmatpush1.msra.mxu0 0.0
    %565 = vmatprep.subr.mxu0 0.0
    %566 = vmatpush1.msra.mxu0 0.0
    %567 = vmatprep.subr.mxu0 0.0
    %568 = vmatpush1.msra.mxu0 0.0
    %569 = vmatprep.subr.mxu0 0.0
    %570 = vmatpush1.msra.mxu0 0.0
    %571 = vmatprep.subr.mxu0 0.0
    %572 = vmatpush1.msra.mxu0 0.0
    %573 = vmatprep.subr.mxu0 0.0
    %574 = vmatpush1.msra.mxu0 0.0
    %575 = vmatprep.subr.mxu0 0.0
    %576 = vmatpush1.msra.mxu0 0.0
    %577 = vmatprep.subr.mxu0 0.0
    %578 = vmatpush1.msra.mxu0 0.0
    %579 = vmatprep.subr.mxu0 0.0
    %580 = vmatpush1.msra.mxu0 0.0
    %581 = vmatprep.subr.mxu0 0.0
    %582 = vmatpush1.msra.mxu0 0.0
    %583 = vmatprep.subr.mxu0 0.0
    %584 = vmatpush1.msra.mxu0 0.0
    %585 = vmatprep.subr.mxu0 0.0
    %586 = vmatpush1.msra.mxu0 0.0
    %587 = vmatprep.subr.mxu0 0.0
    %588 = vmatpush1.msra.mxu0 0.0
    %589 = vmatprep.subr.mxu0 0.0
    %590 = vmatpush1.msra.mxu0 0.0
    %591 = vmatprep.subr.mxu0 0.0
    %592 = vmatpush1.msra.mxu0 0.0
    %593 = vmatprep.subr.mxu0 0.0
    %594 = vmatpush1.msra.mxu0 0.0
    %595 = vmatprep.subr.mxu0 0.0
    %596 = vmatpush1.msra.mxu0 0.0
    %597 = vmatprep.subr.mxu0 0.0
    %598 = vmatpush1.msra.mxu0 0.0
    %599 = vmatprep.subr.mxu0 0.0
    %600 = vmatpush1.msra.mxu0 0.0
    %601 = vmatprep.subr.mxu0 0.0
    %602 = vmatpush1.msra.mxu0 0.0
    %603 = vmatprep.subr.mxu0 0.0
    %604 = vmatpush1.msra.mxu0 0.0
    %605 = vmatprep.mubr.f32.mxu0 0.0
    %606 = vmatmul.mubr.f32.gmra.mrb[0].mxu0 %v469
    %v607 = vpop.f32.mrb[0].mxu0
    %v608 = vadd.f32 0.0, %v607
    %v609 = vpop.f32.mrb[0].mxu0
    %610 = vdwg.mxu0
    %vm611 = vcmp.ge.f32.partialorder %v538, %v608
    %v612 = vsel %vm611, %v538, %v608
    %vm613 = vcmp.ge.s32.totalorder %v31, 8
    %v614 = vsel %vm613, 16, 0
    %v615 = vsub.s32 %v450, %v614
    %v616 = vadd.s32 %v615, 1
    %v617 = vsel %vm611, %v615, %v616
    %vm618 = vcmask 64512
    %619 = vst.msk [vmem:[#allocation2] sm:$0xff] %vm618, %v617
    %620 = vrot.lane.b32.xlu0 %v617, 120
    %v621 = vpop.permute.xlu0 %620
    %s622 = scalar_lea.vmem [#allocation2], 8
    %623 = vst.msk [vmem:[%s622] sm:$0xff] %vm618, %v621
    %vm624 = vcmp.ne.s32.totalorder %v31, 8
    %vm625 = vmand %vm36, %vm624
    %vm626 = vmand %vm37, %vm624
    %vm627 = vcmp.ne.s32.totalorder %v31, 7
    %vm628 = vmand %vm41, %vm627
    %vm629 = vmand %vm42, %vm627
    %v630 = vsel %vm625, 1.0, 0.0
    %v631 = vsel %vm626, 1.0, 0.0
    %v632 = vsel %vm628, 1.0, 0.0
    %v633 = vsel %vm629, 1.0, 0.0
    %vm634 = vcmask 130048
    %v636 = vsel %vm634, %v612, 0
    %638 = vmatprep.subr.mxu0 0.0
    %639 = vmatpush1.msra.mxu0 %v630
    %640 = vmatprep.subr.mxu0 0.0
    %641 = vmatpush1.msra.mxu0 %v631
    %642 = vmatprep.subr.mxu0 0.0
    %643 = vmatpush1.msra.mxu0 0.0
    %644 = vmatprep.subr.mxu0 0.0
    %645 = vmatpush1.msra.mxu0 0.0
    %646 = vmatprep.subr.mxu0 0.0
    %647 = vmatpush1.msra.mxu0 0.0
    %648 = vmatprep.subr.mxu0 0.0
    %649 = vmatpush1.msra.mxu0 0.0
    %650 = vmatprep.subr.mxu0 0.0
    %651 = vmatpush1.msra.mxu0 0.0
    %652 = vmatprep.subr.mxu0 0.0
    %653 = vmatpush1.msra.mxu0 0.0
    %654 = vmatprep.subr.mxu0 0.0
    %655 = vmatpush1.msra.mxu0 0.0
    %656 = vmatprep.subr.mxu0 0.0
    %657 = vmatpush1.msra.mxu0 0.0
    %658 = vmatprep.subr.mxu0 0.0
    %659 = vmatpush1.msra.mxu0 0.0
    %660 = vmatprep.subr.mxu0 0.0
    %661 = vmatpush1.msra.mxu0 0.0
    %662 = vmatprep.subr.mxu0 0.0
    %663 = vmatpush1.msra.mxu0 0.0
    %664 = vmatprep.subr.mxu0 0.0
    %665 = vmatpush1.msra.mxu0 0.0
    %666 = vmatprep.subr.mxu0 0.0
    %667 = vmatpush1.msra.mxu0 0.0
    %668 = vmatprep.subr.mxu0 0.0
    %669 = vmatpush1.msra.mxu0 0.0
    %670 = vmatprep.subr.mxu0 0.0
    %671 = vmatpush1.msra.mxu0 0.0
    %672 = vmatprep.subr.mxu0 0.0
    %673 = vmatpush1.msra.mxu0 0.0
    %674 = vmatprep.subr.mxu0 0.0
    %675 = vmatpush1.msra.mxu0 0.0
    %676 = vmatprep.subr.mxu0 0.0
    %677 = vmatpush1.msra.mxu0 0.0
    %678 = vmatprep.subr.mxu0 0.0
    %679 = vmatpush1.msra.mxu0 0.0
    %680 = vmatprep.subr.mxu0 0.0
    %681 = vmatpush1.msra.mxu0 0.0
    %682 = vmatprep.subr.mxu0 0.0
    %683 = vmatpush1.msra.mxu0 0.0
    %684 = vmatprep.subr.mxu0 0.0
    %685 = vmatpush1.msra.mxu0 0.0
    %686 = vmatprep.subr.mxu0 0.0
    %687 = vmatpush1.msra.mxu0 0.0
    %688 = vmatprep.subr.mxu0 0.0
    %689 = vmatpush1.msra.mxu0 0.0
    %690 = vmatprep.subr.mxu0 0.0
    %691 = vmatpush1.msra.mxu0 0.0
    %692 = vmatprep.subr.mxu0 0.0
    %693 = vmatpush1.msra.mxu0 0.0
    %694 = vmatprep.subr.mxu0 0.0
    %695 = vmatpush1.msra.mxu0 0.0
    %696 = vmatprep.subr.mxu0 0.0
    %697 = vmatpush1.msra.mxu0 0.0
    %698 = vmatprep.subr.mxu0 0.0
    %699 = vmatpush1.msra.mxu0 0.0
    %700 = vmatprep.subr.mxu0 0.0
    %701 = vmatpush1.msra.mxu0 0.0
    %702 = vmatprep.mubr.f32.mxu0 0.0
    %703 = vmatmul.mubr.f32.gmra.mrb[0].mxu0 %v636
    %v704 = vpop.f32.mrb[0].mxu0
    %v705 = vadd.f32 0.0, %v704
    %v706 = vpop.f32.mrb[0].mxu0
    %707 = vdwg.mxu0
    %708 = vmatprep.subr.mxu0 0.0
    %709 = vmatpush1.msra.mxu0 %v632
    %710 = vmatprep.subr.mxu0 0.0
    %711 = vmatpush1.msra.mxu0 %v633
    %712 = vmatprep.subr.mxu0 0.0
    %713 = vmatpush1.msra.mxu0 0.0
    %714 = vmatprep.subr.mxu0 0.0
    %715 = vmatpush1.msra.mxu0 0.0
    %716 = vmatprep.subr.mxu0 0.0
    %717 = vmatpush1.msra.mxu0 0.0
    %718 = vmatprep.subr.mxu0 0.0
    %719 = vmatpush1.msra.mxu0 0.0
    %720 = vmatprep.subr.mxu0 0.0
    %721 = vmatpush1.msra.mxu0 0.0
    %722 = vmatprep.subr.mxu0 0.0
    %723 = vmatpush1.msra.mxu0 0.0
    %724 = vmatprep.subr.mxu0 0.0
    %725 = vmatpush1.msra.mxu0 0.0
    %726 = vmatprep.subr.mxu0 0.0
    %727 = vmatpush1.msra.mxu0 0.0
    %728 = vmatprep.subr.mxu0 0.0
    %729 = vmatpush1.msra.mxu0 0.0
    %730 = vmatprep.subr.mxu0 0.0
    %731 = vmatpush1.msra.mxu0 0.0
    %732 = vmatprep.subr.mxu0 0.0
    %733 = vmatpush1.msra.mxu0 0.0
    %734 = vmatprep.subr.mxu0 0.0
    %735 = vmatpush1.msra.mxu0 0.0
    %736 = vmatprep.subr.mxu0 0.0
    %737 = vmatpush1.msra.mxu0 0.0
    %738 = vmatprep.subr.mxu0 0.0
    %739 = vmatpush1.msra.mxu0 0.0
    %740 = vmatprep.subr.mxu0 0.0
    %741 = vmatpush1.msra.mxu0 0.0
    %742 = vmatprep.subr.mxu0 0.0
    %743 = vmatpush1.msra.mxu0 0.0
    %744 = vmatprep.subr.mxu0 0.0
    %745 = vmatpush1.msra.mxu0 0.0
    %746 = vmatprep.subr.mxu0 0.0
    %747 = vmatpush1.msra.mxu0 0.0
    %748 = vmatprep.subr.mxu0 0.0
    %749 = vmatpush1.msra.mxu0 0.0
    %750 = vmatprep.subr.mxu0 0.0
    %751 = vmatpush1.msra.mxu0 0.0
    %752 = vmatprep.subr.mxu0 0.0
    %753 = vmatpush1.msra.mxu0 0.0
    %754 = vmatprep.subr.mxu0 0.0
    %755 = vmatpush1.msra.mxu0 0.0
    %756 = vmatprep.subr.mxu0 0.0
    %757 = vmatpush1.msra.mxu0 0.0
    %758 = vmatprep.subr.mxu0 0.0
    %759 = vmatpush1.msra.mxu0 0.0
    %760 = vmatprep.subr.mxu0 0.0
    %761 = vmatpush1.msra.mxu0 0.0
    %762 = vmatprep.subr.mxu0 0.0
    %763 = vmatpush1.msra.mxu0 0.0
    %764 = vmatprep.subr.mxu0 0.0
    %765 = vmatpush1.msra.mxu0 0.0
    %766 = vmatprep.subr.mxu0 0.0
    %767 = vmatpush1.msra.mxu0 0.0
    %768 = vmatprep.subr.mxu0 0.0
    %769 = vmatpush1.msra.mxu0 0.0
    %770 = vmatprep.subr.mxu0 0.0
    %771 = vmatpush1.msra.mxu0 0.0
    %772 = vmatprep.mubr.f32.mxu0 0.0
    %773 = vmatmul.mubr.f32.gmra.mrb[0].mxu0 %v636
    %v774 = vpop.f32.mrb[0].mxu0
    %v775 = vadd.f32 0.0, %v774
    %v776 = vpop.f32.mrb[0].mxu0
    %777 = vdwg.mxu0
    %v778 = vld [vmem:[%s3] sm:$0xff]
    %v779 = vld [vmem:[%s3 + $0x8] sm:$0xff]
    %s780 = scalar_lea.vmem %s3, 16
    %v781 = vld [vmem:[%s780] sm:$0xff]
    %v782 = vld [vmem:[%s780 + $0x8] sm:$0xff]
    %v784 = vsel %vm618, %v781, 0
    %v787 = vsel %vm618, %v782, 0
    %789 = vmatprep.subr.mxu0 0.0
    %790 = vmatpush1.msra.mxu0 %v612
    %791 = vmatprep.subr.mxu0 0.0
    %792 = vmatpush1.msra.mxu0 0.0
    %793 = vmatprep.subr.mxu0 0.0
    %794 = vmatpush1.msra.mxu0 0.0
    %795 = vmatprep.subr.mxu0 0.0
    %796 = vmatpush1.msra.mxu0 0.0
    %797 = vmatprep.subr.mxu0 0.0
    %798 = vmatpush1.msra.mxu0 0.0
    %799 = vmatprep.subr.mxu0 0.0
    %800 = vmatpush1.msra.mxu0 0.0
    %801 = vmatprep.subr.mxu0 0.0
    %802 = vmatpush1.msra.mxu0 0.0
    %803 = vmatprep.subr.mxu0 0.0
    %804 = vmatpush1.msra.mxu0 0.0
    %805 = vmatprep.subr.mxu0 0.0
    %806 = vmatpush1.msra.mxu0 0.0
    %807 = vmatprep.subr.mxu0 0.0
    %808 = vmatpush1.msra.mxu0 0.0
    %809 = vmatprep.subr.mxu0 0.0
    %810 = vmatpush1.msra.mxu0 0.0
    %811 = vmatprep.subr.mxu0 0.0
    %812 = vmatpush1.msra.mxu0 0.0
    %813 = vmatprep.subr.mxu0 0.0
    %814 = vmatpush1.msra.mxu0 0.0
    %815 = vmatprep.subr.mxu0 0.0
    %816 = vmatpush1.msra.mxu0 0.0
    %817 = vmatprep.subr.mxu0 0.0
    %818 = vmatpush1.msra.mxu0 0.0
    %819 = vmatprep.subr.mxu0 0.0
    %820 = vmatpush1.msra.mxu0 0.0
    %821 = vmatprep.subr.mxu0 0.0
    %822 = vmatpush1.msra.mxu0 0.0
    %823 = vmatprep.subr.mxu0 0.0
    %824 = vmatpush1.msra.mxu0 0.0
    %825 = vmatprep.subr.mxu0 0.0
    %826 = vmatpush1.msra.mxu0 0.0
    %827 = vmatprep.subr.mxu0 0.0
    %828 = vmatpush1.msra.mxu0 0.0
    %829 = vmatprep.subr.mxu0 0.0
    %830 = vmatpush1.msra.mxu0 0.0
    %831 = vmatprep.subr.mxu0 0.0
    %832 = vmatpush1.msra.mxu0 0.0
    %833 = vmatprep.subr.mxu0 0.0
    %834 = vmatpush1.msra.mxu0 0.0
    %835 = vmatprep.subr.mxu0 0.0
    %836 = vmatpush1.msra.mxu0 0.0
    %837 = vmatprep.subr.mxu0 0.0
    %838 = vmatpush1.msra.mxu0 0.0
    %839 = vmatprep.subr.mxu0 0.0
    %840 = vmatpush1.msra.mxu0 0.0
    %841 = vmatprep.subr.mxu0 0.0
    %842 = vmatpush1.msra.mxu0 0.0
    %843 = vmatprep.subr.mxu0 0.0
    %844 = vmatpush1.msra.mxu0 0.0
    %845 = vmatprep.subr.mxu0 0.0
    %846 = vmatpush1.msra.mxu0 0.0
    %847 = vmatprep.subr.mxu0 0.0
    %848 = vmatpush1.msra.mxu0 0.0
    %849 = vmatprep.subr.mxu0 0.0
    %850 = vmatpush1.msra.mxu0 0.0
    %851 = vmatprep.subr.mxu0 0.0
    %852 = vmatpush1.msra.mxu0 0.0
    %853 = vmatprep.mubr.f32.mxu0 0.0
    %854 = vmatmul.mubr.f32.gmra.mrb[0].mxu0 %v784
    %v855 = vpop.f32.mrb[0].mxu0
    %v856 = vadd.f32 0.0, %v855
    %v857 = vpop.f32.mrb[0].mxu0
    %858 = vmatprep.mubr.f32.mxu0 0.0
    %859 = vmatmul.mubr.f32.gmra.mrb[0].mxu0 %v787
    %v860 = vpop.f32.mrb[0].mxu0
    %v861 = vadd.f32 0.0, %v860
    %v862 = vpop.f32.mrb[0].mxu0
    %863 = vdwg.mxu0
    %v865 = vsel %vm618, %v778, 0
    %v868 = vsel %vm618, %v779, 0
    %870 = vmatprep.subr.mxu0 0.0
    %871 = vmatpush1.msra.mxu0 %v705
    %872 = vmatprep.subr.mxu0 0.0
    %873 = vmatpush1.msra.mxu0 0.0
    %874 = vmatprep.subr.mxu0 0.0
    %875 = vmatpush1.msra.mxu0 0.0
    %876 = vmatprep.subr.mxu0 0.0
    %877 = vmatpush1.msra.mxu0 0.0
    %878 = vmatprep.subr.mxu0 0.0
    %879 = vmatpush1.msra.mxu0 0.0
    %880 = vmatprep.subr.mxu0 0.0
    %881 = vmatpush1.msra.mxu0 0.0
    %882 = vmatprep.subr.mxu0 0.0
    %883 = vmatpush1.msra.mxu0 0.0
    %884 = vmatprep.subr.mxu0 0.0
    %885 = vmatpush1.msra.mxu0 0.0
    %886 = vmatprep.subr.mxu0 0.0
    %887 = vmatpush1.msra.mxu0 0.0
    %888 = vmatprep.subr.mxu0 0.0
    %889 = vmatpush1.msra.mxu0 0.0
    %890 = vmatprep.subr.mxu0 0.0
    %891 = vmatpush1.msra.mxu0 0.0
    %892 = vmatprep.subr.mxu0 0.0
    %893 = vmatpush1.msra.mxu0 0.0
    %894 = vmatprep.subr.mxu0 0.0
    %895 = vmatpush1.msra.mxu0 0.0
    %896 = vmatprep.subr.mxu0 0.0
    %897 = vmatpush1.msra.mxu0 0.0
    %898 = vmatprep.subr.mxu0 0.0
    %899 = vmatpush1.msra.mxu0 0.0
    %900 = vmatprep.subr.mxu0 0.0
    %901 = vmatpush1.msra.mxu0 0.0
    %902 = vmatprep.subr.mxu0 0.0
    %903 = vmatpush1.msra.mxu0 0.0
    %904 = vmatprep.subr.mxu0 0.0
    %905 = vmatpush1.msra.mxu0 0.0
    %906 = vmatprep.subr.mxu0 0.0
    %907 = vmatpush1.msra.mxu0 0.0
    %908 = vmatprep.subr.mxu0 0.0
    %909 = vmatpush1.msra.mxu0 0.0
    %910 = vmatprep.subr.mxu0 0.0
    %911 = vmatpush1.msra.mxu0 0.0
    %912 = vmatprep.subr.mxu0 0.0
    %913 = vmatpush1.msra.mxu0 0.0
    %914 = vmatprep.subr.mxu0 0.0
    %915 = vmatpush1.msra.mxu0 0.0
    %916 = vmatprep.subr.mxu0 0.0
    %917 = vmatpush1.msra.mxu0 0.0
    %918 = vmatprep.subr.mxu0 0.0
    %919 = vmatpush1.msra.mxu0 0.0
    %920 = vmatprep.subr.mxu0 0.0
    %921 = vmatpush1.msra.mxu0 0.0
    %922 = vmatprep.subr.mxu0 0.0
    %923 = vmatpush1.msra.mxu0 0.0
    %924 = vmatprep.subr.mxu0 0.0
    %925 = vmatpush1.msra.mxu0 0.0
    %926 = vmatprep.subr.mxu0 0.0
    %927 = vmatpush1.msra.mxu0 0.0
    %928 = vmatprep.subr.mxu0 0.0
    %929 = vmatpush1.msra.mxu0 0.0
    %930 = vmatprep.subr.mxu0 0.0
    %931 = vmatpush1.msra.mxu0 0.0
    %932 = vmatprep.subr.mxu0 0.0
    %933 = vmatpush1.msra.mxu0 0.0
    %934 = vmatprep.mubr.f32.mxu0 0.0
    %935 = vmatmul.mubr.f32.gmra.mrb[0].mxu0 %v865
    %v936 = vpop.f32.mrb[0].mxu0
    %v937 = vadd.f32 %v856, %v936
    %v938 = vpop.f32.mrb[0].mxu0
    %939 = vmatprep.mubr.f32.mxu0 0.0
    %940 = vmatmul.mubr.f32.gmra.mrb[0].mxu0 %v868
    %v941 = vpop.f32.mrb[0].mxu0
    %v942 = vadd.f32 %v861, %v941
    %v943 = vpop.f32.mrb[0].mxu0
    %944 = vdwg.mxu0
    %s945 = scalar_lea.vmem %s3, 32
    %v946 = vld [vmem:[%s945] sm:$0xff]
    %v947 = vld [vmem:[%s945 + $0x8] sm:$0xff]
    %v949 = vsel %vm618, %v946, 0
    %v952 = vsel %vm618, %v947, 0
    %954 = vmatprep.subr.mxu0 0.0
    %955 = vmatpush1.msra.mxu0 %v775
    %956 = vmatprep.subr.mxu0 0.0
    %957 = vmatpush1.msra.mxu0 0.0
    %958 = vmatprep.subr.mxu0 0.0
    %959 = vmatpush1.msra.mxu0 0.0
    %960 = vmatprep.subr.mxu0 0.0
    %961 = vmatpush1.msra.mxu0 0.0
    %962 = vmatprep.subr.mxu0 0.0
    %963 = vmatpush1.msra.mxu0 0.0
    %964 = vmatprep.subr.mxu0 0.0
    %965 = vmatpush1.msra.mxu0 0.0
    %966 = vmatprep.subr.mxu0 0.0
    %967 = vmatpush1.msra.mxu0 0.0
    %968 = vmatprep.subr.mxu0 0.0
    %969 = vmatpush1.msra.mxu0 0.0
    %970 = vmatprep.subr.mxu0 0.0
    %971 = vmatpush1.msra.mxu0 0.0
    %972 = vmatprep.subr.mxu0 0.0
    %973 = vmatpush1.msra.mxu0 0.0
    %974 = vmatprep.subr.mxu0 0.0
    %975 = vmatpush1.msra.mxu0 0.0
    %976 = vmatprep.subr.mxu0 0.0
    %977 = vmatpush1.msra.mxu0 0.0
    %978 = vmatprep.subr.mxu0 0.0
    %979 = vmatpush1.msra.mxu0 0.0
    %980 = vmatprep.subr.mxu0 0.0
    %981 = vmatpush1.msra.mxu0 0.0
    %982 = vmatprep.subr.mxu0 0.0
    %983 = vmatpush1.msra.mxu0 0.0
    %984 = vmatprep.subr.mxu0 0.0
    %985 = vmatpush1.msra.mxu0 0.0
    %986 = vmatprep.subr.mxu0 0.0
    %987 = vmatpush1.msra.mxu0 0.0
    %988 = vmatprep.subr.mxu0 0.0
    %989 = vmatpush1.msra.mxu0 0.0
    %990 = vmatprep.subr.mxu0 0.0
    %991 = vmatpush1.msra.mxu0 0.0
    %992 = vmatprep.subr.mxu0 0.0
    %993 = vmatpush1.msra.mxu0 0.0
    %994 = vmatprep.subr.mxu0 0.0
    %995 = vmatpush1.msra.mxu0 0.0
    %996 = vmatprep.subr.mxu0 0.0
    %997 = vmatpush1.msra.mxu0 0.0
    %998 = vmatprep.subr.mxu0 0.0
    %999 = vmatpush1.msra.mxu0 0.0
    %1000 = vmatprep.subr.mxu0 0.0
    %1001 = vmatpush1.msra.mxu0 0.0
    %1002 = vmatprep.subr.mxu0 0.0
    %1003 = vmatpush1.msra.mxu0 0.0
    %1004 = vmatprep.subr.mxu0 0.0
    %1005 = vmatpush1.msra.mxu0 0.0
    %1006 = vmatprep.subr.mxu0 0.0
    %1007 = vmatpush1.msra.mxu0 0.0
    %1008 = vmatprep.subr.mxu0 0.0
    %1009 = vmatpush1.msra.mxu0 0.0
    %1010 = vmatprep.subr.mxu0 0.0
    %1011 = vmatpush1.msra.mxu0 0.0
    %1012 = vmatprep.subr.mxu0 0.0
    %1013 = vmatpush1.msra.mxu0 0.0
    %1014 = vmatprep.subr.mxu0 0.0
    %1015 = vmatpush1.msra.mxu0 0.0
    %1016 = vmatprep.subr.mxu0 0.0
    %1017 = vmatpush1.msra.mxu0 0.0
    %1018 = vmatprep.mubr.f32.mxu0 0.0
    %1019 = vmatmul.mubr.f32.gmra.mrb[0].mxu0 %v949
    %v1020 = vpop.f32.mrb[0].mxu0
    %v1021 = vadd.f32 0.0, %v1020
    %v1022 = vpop.f32.mrb[0].mxu0
    %1023 = vmatprep.mubr.f32.mxu0 0.0
    %1024 = vmatmul.mubr.f32.gmra.mrb[0].mxu0 %v952
    %v1025 = vpop.f32.mrb[0].mxu0
    %v1026 = vadd.f32 0.0, %v1025
    %v1027 = vpop.f32.mrb[0].mxu0
    %1028 = vdwg.mxu0
    %v1029 = vadd.f32 %v937, %v1021
    %v1030 = vadd.f32 %v942, %v1026
    %v1031 = vld [vmem:[%s4] sm:$0xff]
    %v1032 = vld [vmem:[%s4 + $0x8] sm:$0xff]
    %1034 = vset.pattern.permute.xlu0 0
    %1035 = vperm.xlu0 %1034, %v1031
    %v1036 = vpop.permute.xlu0 %1035
    %1039 = vset.pattern.permute.xlu0 0
    %1040 = vperm.xlu0 %1039, %v1032
    %v1041 = vpop.permute.xlu0 %1040
    %v1043 = vadd.f32 %v1029, %v1036
    %v1044 = vadd.f32 %v1030, %v1041
    %v1045 = vmax.f32 %v1043, 0.0
    %v1046 = vmax.f32 %v1044, 0.0
    %v1048 = vsel %vm634, %v1045, 0
    %v1051 = vsel %vm634, %v1046, 0
    %1053 = vmatprep.subr.mxu0 0.0
    %1054 = vmatpush1.msra.mxu0 %v455
    %1055 = vmatprep.subr.mxu0 0.0
    %1056 = vmatpush1.msra.mxu0 %v456
    %1057 = vmatprep.subr.mxu0 0.0
    %1058 = vmatpush1.msra.mxu0 0.0
    %1059 = vmatprep.subr.mxu0 0.0
    %1060 = vmatpush1.msra.mxu0 0.0
    %1061 = vmatprep.subr.mxu0 0.0
    %1062 = vmatpush1.msra.mxu0 0.0
    %1063 = vmatprep.subr.mxu0 0.0
    %1064 = vmatpush1.msra.mxu0 0.0
    %1065 = vmatprep.subr.mxu0 0.0
    %1066 = vmatpush1.msra.mxu0 0.0
    %1067 = vmatprep.subr.mxu0 0.0
    %1068 = vmatpush1.msra.mxu0 0.0
    %1069 = vmatprep.subr.mxu0 0.0
    %1070 = vmatpush1.msra.mxu0 0.0
    %1071 = vmatprep.subr.mxu0 0.0
    %1072 = vmatpush1.msra.mxu0 0.0
    %1073 = vmatprep.subr.mxu0 0.0
    %1074 = vmatpush1.msra.mxu0 0.0
    %1075 = vmatprep.subr.mxu0 0.0
    %1076 = vmatpush1.msra.mxu0 0.0
    %1077 = vmatprep.subr.mxu0 0.0
    %1078 = vmatpush1.msra.mxu0 0.0
    %1079 = vmatprep.subr.mxu0 0.0
    %1080 = vmatpush1.msra.mxu0 0.0
    %1081 = vmatprep.subr.mxu0 0.0
    %1082 = vmatpush1.msra.mxu0 0.0
    %1083 = vmatprep.subr.mxu0 0.0
    %1084 = vmatpush1.msra.mxu0 0.0
    %1085 = vmatprep.subr.mxu0 0.0
    %1086 = vmatpush1.msra.mxu0 0.0
    %1087 = vmatprep.subr.mxu0 0.0
    %1088 = vmatpush1.msra.mxu0 0.0
    %1089 = vmatprep.subr.mxu0 0.0
    %1090 = vmatpush1.msra.mxu0 0.0
    %1091 = vmatprep.subr.mxu0 0.0
    %1092 = vmatpush1.msra.mxu0 0.0
    %1093 = vmatprep.subr.mxu0 0.0
    %1094 = vmatpush1.msra.mxu0 0.0
    %1095 = vmatprep.subr.mxu0 0.0
    %1096 = vmatpush1.msra.mxu0 0.0
    %1097 = vmatprep.subr.mxu0 0.0
    %1098 = vmatpush1.msra.mxu0 0.0
    %1099 = vmatprep.subr.mxu0 0.0
    %1100 = vmatpush1.msra.mxu0 0.0
    %1101 = vmatprep.subr.mxu0 0.0
    %1102 = vmatpush1.msra.mxu0 0.0
    %1103 = vmatprep.subr.mxu0 0.0
    %1104 = vmatpush1.msra.mxu0 0.0
    %1105 = vmatprep.subr.mxu0 0.0
    %1106 = vmatpush1.msra.mxu0 0.0
    %1107 = vmatprep.subr.mxu0 0.0
    %1108 = vmatpush1.msra.mxu0 0.0
    %1109 = vmatprep.subr.mxu0 0.0
    %1110 = vmatpush1.msra.mxu0 0.0
    %1111 = vmatprep.subr.mxu0 0.0
    %1112 = vmatpush1.msra.mxu0 0.0
    %1113 = vmatprep.subr.mxu0 0.0
    %1114 = vmatpush1.msra.mxu0 0.0
    %1115 = vmatprep.subr.mxu0 0.0
    %1116 = vmatpush1.msra.mxu0 0.0
    %1117 = vmatprep.mubr.f32.mxu0 0.0
    %1118 = vmatmul.mubr.f32.gmra.mrb[0].mxu0 %v1048
    %v1119 = vpop.f32.mrb[0].mxu0
    %v1120 = vadd.f32 0.0, %v1119
    %v1121 = vpop.f32.mrb[0].mxu0
    %1122 = vmatprep.mubr.f32.mxu0 0.0
    %1123 = vmatmul.mubr.f32.gmra.mrb[0].mxu0 %v1051
    %v1124 = vpop.f32.mrb[0].mxu0
    %v1125 = vadd.f32 0.0, %v1124
    %v1126 = vpop.f32.mrb[0].mxu0
    %1127 = vdwg.mxu0
    %1128 = vmatprep.subr.mxu0 0.0
    %1129 = vmatpush1.msra.mxu0 %v464
    %1130 = vmatprep.subr.mxu0 0.0
    %1131 = vmatpush1.msra.mxu0 %v465
    %1132 = vmatprep.subr.mxu0 0.0
    %1133 = vmatpush1.msra.mxu0 0.0
    %1134 = vmatprep.subr.mxu0 0.0
    %1135 = vmatpush1.msra.mxu0 0.0
    %1136 = vmatprep.subr.mxu0 0.0
    %1137 = vmatpush1.msra.mxu0 0.0
    %1138 = vmatprep.subr.mxu0 0.0
    %1139 = vmatpush1.msra.mxu0 0.0
    %1140 = vmatprep.subr.mxu0 0.0
    %1141 = vmatpush1.msra.mxu0 0.0
    %1142 = vmatprep.subr.mxu0 0.0
    %1143 = vmatpush1.msra.mxu0 0.0
    %1144 = vmatprep.subr.mxu0 0.0
    %1145 = vmatpush1.msra.mxu0 0.0
    %1146 = vmatprep.subr.mxu0 0.0
    %1147 = vmatpush1.msra.mxu0 0.0
    %1148 = vmatprep.subr.mxu0 0.0
    %1149 = vmatpush1.msra.mxu0 0.0
    %1150 = vmatprep.subr.mxu0 0.0
    %1151 = vmatpush1.msra.mxu0 0.0
    %1152 = vmatprep.subr.mxu0 0.0
    %1153 = vmatpush1.msra.mxu0 0.0
    %1154 = vmatprep.subr.mxu0 0.0
    %1155 = vmatpush1.msra.mxu0 0.0
    %1156 = vmatprep.subr.mxu0 0.0
    %1157 = vmatpush1.msra.mxu0 0.0
    %1158 = vmatprep.subr.mxu0 0.0
    %1159 = vmatpush1.msra.mxu0 0.0
    %1160 = vmatprep.subr.mxu0 0.0
    %1161 = vmatpush1.msra.mxu0 0.0
    %1162 = vmatprep.subr.mxu0 0.0
    %1163 = vmatpush1.msra.mxu0 0.0
    %1164 = vmatprep.subr.mxu0 0.0
    %1165 = vmatpush1.msra.mxu0 0.0
    %1166 = vmatprep.subr.mxu0 0.0
    %1167 = vmatpush1.msra.mxu0 0.0
    %1168 = vmatprep.subr.mxu0 0.0
    %1169 = vmatpush1.msra.mxu0 0.0
    %1170 = vmatprep.subr.mxu0 0.0
    %1171 = vmatpush1.msra.mxu0 0.0
    %1172 = vmatprep.subr.mxu0 0.0
    %1173 = vmatpush1.msra.mxu0 0.0
    %1174 = vmatprep.subr.mxu0 0.0
    %1175 = vmatpush1.msra.mxu0 0.0
    %1176 = vmatprep.subr.mxu0 0.0
    %1177 = vmatpush1.msra.mxu0 0.0
    %1178 = vmatprep.subr.mxu0 0.0
    %1179 = vmatpush1.msra.mxu0 0.0
    %1180 = vmatprep.subr.mxu0 0.0
    %1181 = vmatpush1.msra.mxu0 0.0
    %1182 = vmatprep.subr.mxu0 0.0
    %1183 = vmatpush1.msra.mxu0 0.0
    %1184 = vmatprep.subr.mxu0 0.0
    %1185 = vmatpush1.msra.mxu0 0.0
    %1186 = vmatprep.subr.mxu0 0.0
    %1187 = vmatpush1.msra.mxu0 0.0
    %1188 = vmatprep.subr.mxu0 0.0
    %1189 = vmatpush1.msra.mxu0 0.0
    %1190 = vmatprep.subr.mxu0 0.0
    %1191 = vmatpush1.msra.mxu0 0.0
    %1192 = vmatprep.mubr.f32.mxu0 0.0
    %1193 = vmatmul.mubr.f32.gmra.mrb[0].mxu0 %v1048
    %v1194 = vpop.f32.mrb[0].mxu0
    %v1195 = vadd.f32 0.0, %v1194
    %v1196 = vpop.f32.mrb[0].mxu0
    %1197 = vmatprep.mubr.f32.mxu0 0.0
    %1198 = vmatmul.mubr.f32.gmra.mrb[0].mxu0 %v1051
    %v1199 = vpop.f32.mrb[0].mxu0
    %v1200 = vadd.f32 0.0, %v1199
    %v1201 = vpop.f32.mrb[0].mxu0
    %1202 = vdwg.mxu0
    %vm1203 = vcmp.ge.f32.partialorder %v1120, %v1195
    %vm1204 = vcmp.ge.f32.partialorder %v1125, %v1200
    %v1205 = vsel %vm1203, %v1120, %v1195
    %v1206 = vsel %vm1204, %v1125, %v1200
    %vm1207 = vcmp.ge.s32.totalorder %v31, 4
    %v1208 = vsel %vm1207, 8, 0
    %v1209 = vsub.s32 %v450, %v1208
    %v1210 = vadd.s32 %v1209, 1
    %v1211 = vsel %vm1203, %v1209, %v1210
    %v1212 = vsel %vm1204, %v1209, %v1210
    %1213 = vst.msk [vmem:[%s7] sm:$0xff] %vm210, %v1211
    %1214 = vst.msk [vmem:[%s7 + $0x8] sm:$0xff] %vm210, %v1212
    %1215 = vrot.lane.b32.xlu0 %v1211, 124
    %v1216 = vpop.permute.xlu0 %1215
    %1217 = vrot.lane.b32.xlu0 %v1212, 124
    %v1218 = vpop.permute.xlu0 %1217
    %s1219 = scalar_lea.vmem %s7, 16
    %1220 = vst.msk [vmem:[%s1219] sm:$0xff] %vm210, %v1216
    %1221 = vst.msk [vmem:[%s1219 + $0x8] sm:$0xff] %vm210, %v1218
    %1222 = vst.msk [vmem:[%s5] sm:$0xff] %vm210, %v1205
    %1223 = vst.msk [vmem:[%s5 + $0x8] sm:$0xff] %vm210, %v1206
    %1226 = vrot.lane.b32.xlu0 %v1205, 124
    %v1227 = vpop.permute.xlu0 %1226
    %1228 = vrot.lane.b32.xlu0 %v1206, 124
    %v1229 = vpop.permute.xlu0 %1228
    %s1232 = scalar_lea.vmem %s5, 16
    %1233 = vst.msk [vmem:[%s1232] sm:$0xff] %vm210, %v1227
    %1234 = vst.msk [vmem:[%s1232 + $0x8] sm:$0xff] %vm210, %v1229
    // Predicated region
    $region22: #{x_enc_forward.1} parent=1 // pred_check
      _
    $region23: #{x_enc_forward.1} parent=1 // pred_check_branch
      %1236 = sbr.rel (0) target = $region25
    $region24: #{x_enc_forward.1} parent=1 // pred_region
      _
    $region25: #{x_enc_forward.1} parent=1 // pred_fallthru
      _
    // Predicated region
    $region26: #{x_enc_forward.1} parent=1 // pred_check
      _
    $region27: #{x_enc_forward.1} parent=1 // pred_check_branch
      %1238 = sbr.rel (0) target = $region29
    $region28: #{x_enc_forward.1} parent=1 // pred_region
      %s1240 = ssub.s32 256, 256
      %1241 = vsyncadd [#allocation3], %s1240
      %s1242 = sshll.u32 [#allocation2], 4
      %s1243 = int_to_ptr.vmem [resolvable:$true] %s1242
      %1248 = dma.vmem_to_hbm [thread:$0]  %s1243, 256, %s6, [#allocation3], 128, 128, 8
    $region29: #{x_enc_forward.1} parent=1 // pred_fallthru
      _
    // Predicated region
    $region30: #{x_enc_forward.1} parent=1 // pred_check
      _
    $region31: #{x_enc_forward.1} parent=1 // pred_check_branch
      %1250 = sbr.rel (0) target = $region33
    $region32: #{x_enc_forward.1} parent=1 // pred_region
      _
    $region33: #{x_enc_forward.1} parent=1 // pred_fallthru
      _
    // Predicated region
    $region34: #{x_enc_forward.1} parent=1 // pred_check
      _
    $region35: #{x_enc_forward.1} parent=1 // pred_check_branch
      %1252 = sbr.rel (0) target = $region37
    $region36: #{x_enc_forward.1} parent=1 // pred_region
      _
    $region37: #{x_enc_forward.1} parent=1 // pred_fallthru
      _
    // Predicated region
    $region38: #{x_enc_forward.1} parent=1 // pred_check
      _
    $region39: #{x_enc_forward.1} parent=1 // pred_check_branch
      %1254 = sbr.rel (0) target = $region41
    $region40: #{x_enc_forward.1} parent=1 // pred_region
      %1255 = dma.done [#allocation3], 256
    $region41: #{x_enc_forward.1} parent=1 // pred_fallthru
      _
    // Predicated region
    $region42: #{x_enc_forward.1} parent=1 // pred_check
      _
    $region43: #{x_enc_forward.1} parent=1 // pred_check_branch
      %1257 = sbr.rel (0) target = $region45
    $region44: #{x_enc_forward.1} parent=1 // pred_region
      _
    $region45: #{x_enc_forward.1} parent=1 // pred_fallthru
      _
    %1258 = vsyncpa [#allocation3], 1

</llo_original>
